<compile_context>
chip_gen: v6e
topology: v6e:2x2x1
jax: 0.10.0
libtpu: 0.0.40
codegen_flags: <defaults>
</compile_context>

<pallas_src>
import functools

import jax
import jax.numpy as jnp
from jax.experimental import pallas as pl
from jax.experimental.pallas import tpu as pltpu

EPS_BN = 0.2          # nn.BatchNorm1d(256, eps=0.2)
FEAT_DIM = 512        # resnet_model output feature dim (x1 = Linear(512, 256))
HID_DIM = 256


def _multitask_kernel(
    x_ref,              # (Bt, C*HW) f32    batch tile of the flattened image
    wbexp_ref, bb_ref,  # fused GAP + backbone Linear: (C*HW, 512) bf16, (1, 512) f32
    w1_ref, b1_ref,     # x1 Linear(512 -> 256): (512, 256) bf16, (1, 256) f32
    wh_ref, bh_ref,     # fused heads (BN folded in): (256, OUT_PAD) bf16, (1, OUT_PAD) f32
    o_ref,              # (Bt, OUT_PAD) f32  fused head logits
):
    # TODO(synk): model_core is an external ResNet backbone passed to __init__;
    # stand-in here = global-average-pool + Linear(C, 512) + ReLU.  The GAP is
    # folded into wbexp at wrapper time so this is one K=C*HW MXU matmul.
    f512 = jnp.dot(x_ref[...].astype(jnp.bfloat16), wbexp_ref[...],
                   preferred_element_type=jnp.float32) + bb_ref[...]
    f512 = jnp.maximum(f512, 0.0)                                 # (Bt, 512)

    # x1 = d_out(bn1(relu(self.x1(features))))  (eval: dropout == identity;
    # the BN affine is folded into wh/bh at wrapper time).
    h = jnp.dot(f512.astype(jnp.bfloat16), w1_ref[...],
                preferred_element_type=jnp.float32) + b1_ref[...]
    h = jnp.maximum(h, 0.0)                                       # (Bt, 256)

    # single fused head matmul -> one lane-dense, unmasked 128-wide store
    o_ref[...] = jnp.dot(h.astype(jnp.bfloat16), wh_ref[...],
                         preferred_element_type=jnp.float32) + bh_ref[...]


def _xavier_normal(key, out_features, in_features):
    std = (2.0 / (in_features + out_features)) ** 0.5
    return std * jax.random.normal(key, (out_features, in_features), jnp.float32)


def init_params(key, in_channels, artist_num, object_num, material_num,
                prediction_year):
    ks = jax.random.split(key, 12)
    p = {}
    # backbone stand-in
    p["wb"] = _xavier_normal(ks[0], FEAT_DIM, in_channels)
    p["bb"] = 0.01 * jax.random.normal(ks[1], (FEAT_DIM,), jnp.float32)
    # x1 (Linear 512 -> 256)
    p["w1"] = _xavier_normal(ks[2], HID_DIM, FEAT_DIM)
    p["b1"] = 0.01 * jax.random.normal(ks[3], (HID_DIM,), jnp.float32)
    # bn1 at init: gamma=1, beta=0, running_mean=0, running_var=1
    p["bn_gamma"] = jnp.ones((HID_DIM,), jnp.float32)
    p["bn_beta"] = jnp.zeros((HID_DIM,), jnp.float32)
    p["bn_mean"] = jnp.zeros((HID_DIM,), jnp.float32)
    p["bn_var"] = jnp.ones((HID_DIM,), jnp.float32)
    # heads
    p["wy1"] = _xavier_normal(ks[4], artist_num, HID_DIM)
    p["by1"] = 0.01 * jax.random.normal(ks[5], (artist_num,), jnp.float32)
    p["wy2"] = _xavier_normal(ks[6], object_num, HID_DIM)
    p["by2"] = 0.01 * jax.random.normal(ks[7], (object_num,), jnp.float32)
    p["wy3"] = _xavier_normal(ks[8], material_num, HID_DIM)
    p["by3"] = 0.01 * jax.random.normal(ks[9], (material_num,), jnp.float32)
    p["wy4"] = _xavier_normal(ks[10], prediction_year, HID_DIM)
    p["by4"] = 0.01 * jax.random.normal(ks[11], (prediction_year,), jnp.float32)
    return p


def _vmem_limit_bytes():
    """Explicit scoped-VMEM limit (default 16/32 MiB is far below physical)."""
    try:
        cap = int(pltpu.get_tpu_info().vmem_capacity_bytes)  # 128 MiB v5e/v6e, 64 MiB v7x
        return min(cap * 3 // 4, 100 * 1024 * 1024)          # ~96 MiB v5e/v6e, ~48 MiB v7x
    except Exception:
        return 48 * 1024 * 1024                              # safe on every generation


def _pick_block_b(batch, chw, out_pad, vmem_limit, block_b=None):
    """Largest batch tile fitting the VMEM budget, spanning >= 2 grid steps."""
    # resident weights: bf16 matrices + f32 biases (pipeline double-buffers them)
    weight_bytes = 2 * (2 * (chw * FEAT_DIM + FEAT_DIM * HID_DIM + HID_DIM * out_pad)
                        + 4 * (FEAT_DIM + HID_DIM + out_pad))
    budget = int(vmem_limit * 0.85) - weight_bytes
    per_row = 2 * 4 * (chw + out_pad)           # double-buffered f32 x row + out row
    bt = max(8, budget // per_row)
    if block_b is not None:
        bt = min(bt, block_b)
    if batch >= 16:
        # keep >= 2 batch tiles so the "parallel" axis can span both v7x
        # TensorCores and the x DMA actually double-buffers against compute
        bt = min(bt, max(8, (batch // 2) // 8 * 8))
    if bt >= batch:
        return batch
    if bt >= 256:
        bt = bt // 256 * 256                    # fill the 2x256x256 MXU (v6e/v7x)
    else:
        bt = max(8, bt // 8 * 8)                # sublane alignment
    return min(bt, batch)


@functools.partial(jax.jit, static_argnames=("block_b",))
def multi_task_resnet_forward(x, params, block_b=None):
    """x: (B, C, H, W) float32 (NCHW). Returns (y1o, y2o, y3o, y4o)."""
    B, C, H, W = x.shape
    HW = H * W
    CHW = C * HW
    # lane/sublane-dense x layout: (B, C*HW).  A (B, C, HW) block would map the
    # tiny C axis to sublanes and pad it to 8 (~2x VMEM inflation of the
    # dominant buffer).  x stays f32: it is read exactly once, so a separate
    # wrapper-side bf16 cast pass would cost more HBM than it saves.
    x2d = x.reshape(B, CHW)

    # ---- wrapper-time constant folding --------------------------------------
    # Fold inference-mode BN into the fused head weights (exact identity since
    # dropout is identity):
    #   bn(h) = (h - mean) * s + beta,      s = gamma * rsqrt(var + eps)
    #   head(bn(h)) = h @ (s * W)^T + ((beta - mean*s) @ W^T + b)
    s = params["bn_gamma"] * jax.lax.rsqrt(params["bn_var"] + EPS_BN)
    shift = params["bn_beta"] - params["bn_mean"] * s

    wy = jnp.concatenate(
        [params["wy1"], params["wy2"], params["wy3"], params["wy4"]], axis=0)  # (n_out, 256)
    by = jnp.concatenate(
        [params["by1"], params["by2"], params["by3"], params["by4"]], axis=0)  # (n_out,)
    wy_f = wy * s[None, :]
    by_f = by + wy @ shift

    n1 = params["wy1"].shape[0]
    n2 = params["wy2"].shape[0]
    n3 = params["wy3"].shape[0]
    n4 = params["wy4"].shape[0]
    n_out = n1 + n2 + n3 + n4
    out_pad = max(128, ((n_out + 127) // 128) * 128)      # lane-dense output width

    wh = jnp.pad(wy_f, ((0, out_pad - n_out), (0, 0))).T.astype(jnp.bfloat16)  # (256, out_pad)
    bh = jnp.pad(by_f, (0, out_pad - n_out)).reshape(1, -1)                    # (1, out_pad) f32

    # Fold GAP into the backbone weight: row c*HW + p of wbexp is wb[:, c] / HW,
    # so x2d @ wbexp == mean_hw(x) @ wb.T exactly (one big-K MXU matmul instead
    # of a cross-lane reduction + K=C matmul that is >95% zero padding).
    wbexp = (jnp.repeat(params["wb"].T, HW, axis=0) / HW).astype(jnp.bfloat16)  # (CHW, 512)
    bb = params["bb"].reshape(1, -1)                  # (1, 512) f32
    w1 = params["w1"].T.astype(jnp.bfloat16)          # (512, 256)
    b1 = params["b1"].reshape(1, -1)                  # (1, 256) f32

    # TODO(synk): for real ResNet spatial sizes (e.g. C=3, 224x224 -> CHW~150K)
    # wbexp is not VMEM-resident; switch to a trailing "arbitrary" grid axis
    # over HW chunks with a VMEM partial-sum scratch and run the three matmuls
    # under pl.when on the final chunk.

    # ---- grid over batch: x / output tiled, weights resident ----------------
    vmem_limit = _vmem_limit_bytes()
    bt = _pick_block_b(B, CHW, out_pad, vmem_limit, block_b)
    grid = (pl.cdiv(B, bt),)

    def resident(a):
        # grid-invariant block (index never changes -> DMA'd once); overhead of
        # the implicit second buffer is ~1.4 MiB total, so no Buffered(1) needed.
        return pl.BlockSpec(a.shape, lambda i: (0, 0))

    in_specs = [
        pl.BlockSpec((bt, CHW), lambda i: (i, 0)),    # x tile over batch
        resident(wbexp), resident(bb),
        resident(w1), resident(b1),
        resident(wh), resident(bh),
    ]
    out_specs = pl.BlockSpec((bt, out_pad), lambda i: (i, 0))

    fused = pl.pallas_call(
        _multitask_kernel,
        out_shape=jax.ShapeDtypeStruct((B, out_pad), jnp.float32),
        grid=grid,
        in_specs=in_specs,
        out_specs=out_specs,
        compiler_params=pltpu.CompilerParams(
            dimension_semantics=("parallel",),        # v7x: shard batch across both TCs
            vmem_limit_bytes=vmem_limit),
    )(x2d, wbexp, bb, w1, b1, wh, bh)

    return (fused[:, :n1],
            fused[:, n1:n1 + n2],
            fused[:, n1 + n2:n1 + n2 + n3],
            fused[:, n1 + n2 + n3:n_out])


def _reference_forward(x, params):
    """Pure-JAX f32 reference for a sanity check."""
    B, C, H, W = x.shape
    feat = jnp.mean(x.reshape(B, C, H * W), axis=-1)
    f512 = jnp.maximum(feat @ params["wb"].T + params["bb"], 0.0)
    h = jnp.maximum(f512 @ params["w1"].T + params["b1"], 0.0)
    h = (h - params["bn_mean"]) / jnp.sqrt(params["bn_var"] + EPS_BN)
    h = h * params["bn_gamma"] + params["bn_beta"]
    return (
        h @ params["wy1"].T + params["by1"],
        h @ params["wy2"].T + params["by2"],
        h @ params["wy3"].T + params["by3"],
        h @ params["wy4"].T + params["by4"],
    )


if __name__ == "__main__":
    key = jax.random.PRNGKey(0)
    k_x, k_p = jax.random.split(key)

    B, C, H, W = 32, 4, 16, 16
    artist_num, object_num, material_num, prediction_year = 16, 12, 10, 8

    x = jax.random.normal(k_x, (B, C, H, W), jnp.float32)
    params = init_params(k_p, C, artist_num, object_num, material_num,
                         prediction_year)

    # auto tile selection -> bt=16, grid of 2 batch tiles at this demo size
    outs = multi_task_resnet_forward(x, params)
    outs = jax.block_until_ready(outs)

    refs = _reference_forward(x, params)
    for o, r in zip(outs, refs):
        assert o.shape == r.shape and o.dtype == jnp.float32
        # bf16 MXU operands (f32 accumulation) -> loosened tolerance vs f32 ref
        assert jnp.max(jnp.abs(o - r)) < 5e-3

    print("KERNEL_OK")
</pallas_src>

<mosaic_0001>
module attributes {stable_mosaic.version = 11 : i64} {
  func.func @_multitask_kernel(%arg0: i32, %arg1: memref<16x1024xf32, #tpu.memory_space<vmem>>, %arg2: memref<1024x512xbf16, #tpu.memory_space<vmem>>, %arg3: memref<1x512xf32, #tpu.memory_space<vmem>>, %arg4: memref<512x256xbf16, #tpu.memory_space<vmem>>, %arg5: memref<1x256xf32, #tpu.memory_space<vmem>>, %arg6: memref<256x128xbf16, #tpu.memory_space<vmem>>, %arg7: memref<1x128xf32, #tpu.memory_space<vmem>>, %arg8: memref<16x128xf32, #tpu.memory_space<vmem>>) attributes {dimension_semantics = [#tpu.dimension_semantics<parallel>], iteration_bounds = array<i64: 2>, scalar_prefetch = 0 : i64, scratch_operands = 0 : i64, tpu.core_type = #tpu.core_type<tc>, window_params = [{transform_indices = @transform_0, window_bounds = array<i64: 16, 1024>}, {pipeline_mode = #tpu.pipeline_mode<synchronous>, transform_indices = @transform_1, window_bounds = array<i64: 1024, 512>}, {pipeline_mode = #tpu.pipeline_mode<synchronous>, transform_indices = @transform_2, window_bounds = array<i64: 1, 512>}, {pipeline_mode = #tpu.pipeline_mode<synchronous>, transform_indices = @transform_3, window_bounds = array<i64: 512, 256>}, {pipeline_mode = #tpu.pipeline_mode<synchronous>, transform_indices = @transform_4, window_bounds = array<i64: 1, 256>}, {pipeline_mode = #tpu.pipeline_mode<synchronous>, transform_indices = @transform_5, window_bounds = array<i64: 256, 128>}, {pipeline_mode = #tpu.pipeline_mode<synchronous>, transform_indices = @transform_6, window_bounds = array<i64: 1, 128>}, {transform_indices = @transform_7, window_bounds = array<i64: 16, 128>}]} {
    %c0 = arith.constant 0 : index
    %c0_0 = arith.constant 0 : index
    %0 = vector.load %arg1[%c0, %c0_0] : memref<16x1024xf32, #tpu.memory_space<vmem>>, vector<16x1024xf32>
    %1 = arith.truncf %0 : vector<16x1024xf32> to vector<16x1024xbf16>
    %c0_1 = arith.constant 0 : index
    %c0_2 = arith.constant 0 : index
    %2 = vector.load %arg2[%c0_1, %c0_2] : memref<1024x512xbf16, #tpu.memory_space<vmem>>, vector<1024x512xbf16>
    %cst = arith.constant dense<0.000000e+00> : vector<16x512xf32>
    %3 = tpu.matmul %1, %2, %cst {dimension_numbers = #tpu.dot_dimension_numbers<[1], [0], [0], [1], [0, 0, 1, 1], [], []>} : vector<16x1024xbf16>, vector<1024x512xbf16>, vector<16x512xf32> -> vector<16x512xf32>
    %c0_3 = arith.constant 0 : index
    %c0_4 = arith.constant 0 : index
    %4 = vector.load %arg3[%c0_3, %c0_4] : memref<1x512xf32, #tpu.memory_space<vmem>>, vector<1x512xf32>
    %5 = vector.broadcast %4 : vector<1x512xf32> to vector<16x512xf32>
    %6 = arith.addf %3, %5 : vector<16x512xf32>
    %cst_5 = arith.constant 0.000000e+00 : f32
    %7 = vector.broadcast %cst_5 : f32 to vector<16x512xf32>
    %8 = arith.maximumf %6, %7 : vector<16x512xf32>
    %9 = arith.truncf %8 : vector<16x512xf32> to vector<16x512xbf16>
    %c0_6 = arith.constant 0 : index
    %c0_7 = arith.constant 0 : index
    %10 = vector.load %arg4[%c0_6, %c0_7] : memref<512x256xbf16, #tpu.memory_space<vmem>>, vector<512x256xbf16>
    %cst_8 = arith.constant dense<0.000000e+00> : vector<16x256xf32>
    %11 = tpu.matmul %9, %10, %cst_8 {dimension_numbers = #tpu.dot_dimension_numbers<[1], [0], [0], [1], [0, 0, 1, 1], [], []>} : vector<16x512xbf16>, vector<512x256xbf16>, vector<16x256xf32> -> vector<16x256xf32>
    %c0_9 = arith.constant 0 : index
    %c0_10 = arith.constant 0 : index
    %12 = vector.load %arg5[%c0_9, %c0_10] : memref<1x256xf32, #tpu.memory_space<vmem>>, vector<1x256xf32>
    %13 = vector.broadcast %12 : vector<1x256xf32> to vector<16x256xf32>
    %14 = arith.addf %11, %13 : vector<16x256xf32>
    %cst_11 = arith.constant 0.000000e+00 : f32
    %15 = vector.broadcast %cst_11 : f32 to vector<16x256xf32>
    %16 = arith.maximumf %14, %15 : vector<16x256xf32>
    %17 = arith.truncf %16 : vector<16x256xf32> to vector<16x256xbf16>
    %c0_12 = arith.constant 0 : index
    %c0_13 = arith.constant 0 : index
    %18 = vector.load %arg6[%c0_12, %c0_13] : memref<256x128xbf16, #tpu.memory_space<vmem>>, vector<256x128xbf16>
    %cst_14 = arith.constant dense<0.000000e+00> : vector<16x128xf32>
    %19 = tpu.matmul %17, %18, %cst_14 {dimension_numbers = #tpu.dot_dimension_numbers<[1], [0], [0], [1], [0, 0, 1, 1], [], []>} : vector<16x256xbf16>, vector<256x128xbf16>, vector<16x128xf32> -> vector<16x128xf32>
    %c0_15 = arith.constant 0 : index
    %c0_16 = arith.constant 0 : index
    %20 = vector.load %arg7[%c0_15, %c0_16] : memref<1x128xf32, #tpu.memory_space<vmem>>, vector<1x128xf32>
    %21 = vector.broadcast %20 : vector<1x128xf32> to vector<16x128xf32>
    %22 = arith.addf %19, %21 : vector<16x128xf32>
    %c0_17 = arith.constant 0 : index
    %c0_18 = arith.constant 0 : index
    %23 = vector.load %arg8[%c0_17, %c0_18] : memref<16x128xf32, #tpu.memory_space<vmem>>, vector<16x128xf32>
    tpu.vector_store %arg8[%c0_17, %c0_18], %22 {strides = array<i32>} : memref<16x128xf32, #tpu.memory_space<vmem>>, vector<16x128xf32>,
    return
  }
  func.func @transform_0(%arg0: i32) -> (i32, i32) {
    %c0_i32 = arith.constant 0 : i32
    %c0_i32_0 = arith.constant 0 : i32
    return %arg0, %c0_i32 : i32, i32
  }
  func.func @transform_1(%arg0: i32) -> (i32, i32) {
    %c0_i32 = arith.constant 0 : i32
    %c0_i32_0 = arith.constant 0 : i32
    %c0_i32_1 = arith.constant 0 : i32
    return %c0_i32, %c0_i32_0 : i32, i32
  }
  func.func @transform_2(%arg0: i32) -> (i32, i32) {
    %c0_i32 = arith.constant 0 : i32
    %c0_i32_0 = arith.constant 0 : i32
    %c0_i32_1 = arith.constant 0 : i32
    return %c0_i32, %c0_i32_0 : i32, i32
  }
  func.func @transform_3(%arg0: i32) -> (i32, i32) {
    %c0_i32 = arith.constant 0 : i32
    %c0_i32_0 = arith.constant 0 : i32
    %c0_i32_1 = arith.constant 0 : i32
    return %c0_i32, %c0_i32_0 : i32, i32
  }
  func.func @transform_4(%arg0: i32) -> (i32, i32) {
    %c0_i32 = arith.constant 0 : i32
    %c0_i32_0 = arith.constant 0 : i32
    %c0_i32_1 = arith.constant 0 : i32
    return %c0_i32, %c0_i32_0 : i32, i32
  }
  func.func @transform_5(%arg0: i32) -> (i32, i32) {
    %c0_i32 = arith.constant 0 : i32
    %c0_i32_0 = arith.constant 0 : i32
    %c0_i32_1 = arith.constant 0 : i32
    return %c0_i32, %c0_i32_0 : i32, i32
  }
  func.func @transform_6(%arg0: i32) -> (i32, i32) {
    %c0_i32 = arith.constant 0 : i32
    %c0_i32_0 = arith.constant 0 : i32
    %c0_i32_1 = arith.constant 0 : i32
    return %c0_i32, %c0_i32_0 : i32, i32
  }
  func.func @transform_7(%arg0: i32) -> (i32, i32) {
    %c0_i32 = arith.constant 0 : i32
    %c0_i32_0 = arith.constant 0 : i32
    return %arg0, %c0_i32 : i32, i32
  }
}

</mosaic_0001>

<llo_original>
// kernel: multi_task_resnet_forward.1
$region0: #{multi_task_resnet_forward.1}
  #allocation0 [shape = 'u32[]', space=smem, size = 0x4, offset = 0x4, fixed_abs, tag = 'smem constant byte address 0x4 - core index']
  #allocation1 [shape = 'u32[144,128]{1,0:T(1,128)}', space=vmem, size = 0x12000, scoped, tag = 'internal scratch']
  %s0 = inlined_call_operand.vmem [shape: f32[32,1024], index: 0, kind: input, shape index: {}]
  %s1 = inlined_call_operand.vmem [shape: bf16[1024,512], index: 1, kind: input, shape index: {}]
  %s2 = inlined_call_operand.vmem [shape: f32[1,512], index: 2, kind: input, shape index: {}]
  %s3 = inlined_call_operand.vmem [shape: bf16[512,256], index: 3, kind: input, shape index: {}]
  %s4 = inlined_call_operand.vmem [shape: f32[1,256], index: 4, kind: input, shape index: {}]
  %s5 = inlined_call_operand.vmem [shape: bf16[256,128], index: 5, kind: input, shape index: {}]
  %s6 = inlined_call_operand.vmem [shape: f32[1,128], index: 6, kind: input, shape index: {}]
  %s7 = inlined_call_operand.vmem [shape: f32[32,128], index: 7, kind: output, shape index: {}]
  %s8 = sld [smem:[#allocation0]]
  $region61: #{multi_task_resnet_forward.1} parent=0
    _
  %s10 = ssub.s32 1, %s8
  %s11 = scalar_select 0, %s10, %s8
  loop: start=0, step=1, limit=4
  $region2: #{multi_task_resnet_forward.1} parent=0 // loop_pre_header
    _
  $region3: #{multi_task_resnet_forward.1} parent=0 // loop_header
    %s13 = sphi 0, %s17
    %p14 = scmp.ge.s32.totalorder %s13, 4
    %s23 = sphi 0, %s25
    %s26 = sphi 0, %s23
    %s27 = sphi 0, %s26
    %s43 = sphi 0, %s27
    %s47 = sphi 0, %s47
    %s49 = sphi 0, %s47
    %s50 = sphi 0, %s49
    %s64 = sphi 0, %s50
    %s68 = sphi 0, %s68
    %s70 = sphi 0, %s68
    %s71 = sphi 0, %s70
    %s85 = sphi 0, %s71
    %s89 = sphi 0, %s89
    %s91 = sphi 0, %s89
    %s92 = sphi 0, %s91
    %s106 = sphi 0, %s92
    %s110 = sphi 0, %s110
    %s112 = sphi 0, %s110
    %s113 = sphi 0, %s112
    %s127 = sphi 0, %s113
    %s131 = sphi 0, %s131
    %s133 = sphi 0, %s131
    %s134 = sphi 0, %s133
    %s148 = sphi 0, %s134
    %s152 = sphi 0, %s152
    %s154 = sphi 0, %s152
    %s155 = sphi 0, %s154
    %s169 = sphi 0, %s155
    %s175 = sphi 0, %s177
    %s178 = sphi 0, %s175
    %s179 = sphi 0, %s178
    %s195 = sphi 0, %s179
  $region4: #{multi_task_resnet_forward.1} parent=0 // loop_header_branch
    %16 = sbr.rel (%p14) target = $region8
  $region5: #{multi_task_resnet_forward.1} parent=0 // loop_body
    %s18 = ssub.s32 %s13, 1
    %s19 = ssub.s32 %s13, 2
    %s20 = sadd.s32 %s13, 1
    %s21 = ssub.s32 %s13, %s20
    %p22 = scmp.eq.s32.totalorder %s21, 0
    %s24 = sadd.s32 %s23, 1
    %s25 = scalar_select %p22, %s23, %s24
    %p28 = pneg %p22
    %p29 = scmp.eq.s32.totalorder %s13, 1
    %p30 = por %p28, %p29
    %p31 = scmp.ne.s32.totalorder %s23, %s26
    %p32 = scmp.eq.s32.totalorder %s13, 0
    %p33 = por %p31, %p32
    %p34 = scmp.ne.s32.totalorder %s23, %s26
    %p35 = scmp.eq.s32.totalorder %s18, 1
    %p36 = por %p34, %p35
    %p37 = scmp.ne.s32.totalorder %s26, %s27
    %p38 = scmp.eq.s32.totalorder %s18, 0
    %p39 = por %p37, %p38
    %p40 = scmp.ne.s32.totalorder %s26, %s27
    %p41 = scmp.eq.s32.totalorder %s19, 1
    %p42 = por %p40, %p41
    %p44 = scmp.ne.s32.totalorder %s27, %s43
    %p45 = scmp.eq.s32.totalorder %s19, 0
    %p46 = por %p44, %p45
    %s48 = sadd.s32 %s47, 1
    %p51 = scmp.eq.s32.totalorder %s13, 1
    %p52 = scmp.ne.s32.totalorder %s47, %s49
    %p53 = scmp.eq.s32.totalorder %s13, 0
    %p54 = por %p52, %p53
    %p55 = scmp.ne.s32.totalorder %s47, %s49
    %p56 = scmp.eq.s32.totalorder %s18, 1
    %p57 = por %p55, %p56
    %p58 = scmp.ne.s32.totalorder %s49, %s50
    %p59 = scmp.eq.s32.totalorder %s18, 0
    %p60 = por %p58, %p59
    %p61 = scmp.ne.s32.totalorder %s49, %s50
    %p62 = scmp.eq.s32.totalorder %s19, 1
    %p63 = por %p61, %p62
    %p65 = scmp.ne.s32.totalorder %s50, %s64
    %p66 = scmp.eq.s32.totalorder %s19, 0
    %p67 = por %p65, %p66
    %s69 = sadd.s32 %s68, 1
    %p72 = scmp.eq.s32.totalorder %s13, 1
    %p73 = scmp.ne.s32.totalorder %s68, %s70
    %p74 = scmp.eq.s32.totalorder %s13, 0
    %p75 = por %p73, %p74
    %p76 = scmp.ne.s32.totalorder %s68, %s70
    %p77 = scmp.eq.s32.totalorder %s18, 1
    %p78 = por %p76, %p77
    %p79 = scmp.ne.s32.totalorder %s70, %s71
    %p80 = scmp.eq.s32.totalorder %s18, 0
    %p81 = por %p79, %p80
    %p82 = scmp.ne.s32.totalorder %s70, %s71
    %p83 = scmp.eq.s32.totalorder %s19, 1
    %p84 = por %p82, %p83
    %p86 = scmp.ne.s32.totalorder %s71, %s85
    %p87 = scmp.eq.s32.totalorder %s19, 0
    %p88 = por %p86, %p87
    %s90 = sadd.s32 %s89, 1
    %p93 = scmp.eq.s32.totalorder %s13, 1
    %p94 = scmp.ne.s32.totalorder %s89, %s91
    %p95 = scmp.eq.s32.totalorder %s13, 0
    %p96 = por %p94, %p95
    %p97 = scmp.ne.s32.totalorder %s89, %s91
    %p98 = scmp.eq.s32.totalorder %s18, 1
    %p99 = por %p97, %p98
    %p100 = scmp.ne.s32.totalorder %s91, %s92
    %p101 = scmp.eq.s32.totalorder %s18, 0
    %p102 = por %p100, %p101
    %p103 = scmp.ne.s32.totalorder %s91, %s92
    %p104 = scmp.eq.s32.totalorder %s19, 1
    %p105 = por %p103, %p104
    %p107 = scmp.ne.s32.totalorder %s92, %s106
    %p108 = scmp.eq.s32.totalorder %s19, 0
    %p109 = por %p107, %p108
    %s111 = sadd.s32 %s110, 1
    %p114 = scmp.eq.s32.totalorder %s13, 1
    %p115 = scmp.ne.s32.totalorder %s110, %s112
    %p116 = scmp.eq.s32.totalorder %s13, 0
    %p117 = por %p115, %p116
    %p118 = scmp.ne.s32.totalorder %s110, %s112
    %p119 = scmp.eq.s32.totalorder %s18, 1
    %p120 = por %p118, %p119
    %p121 = scmp.ne.s32.totalorder %s112, %s113
    %p122 = scmp.eq.s32.totalorder %s18, 0
    %p123 = por %p121, %p122
    %p124 = scmp.ne.s32.totalorder %s112, %s113
    %p125 = scmp.eq.s32.totalorder %s19, 1
    %p126 = por %p124, %p125
    %p128 = scmp.ne.s32.totalorder %s113, %s127
    %p129 = scmp.eq.s32.totalorder %s19, 0
    %p130 = por %p128, %p129
    %s132 = sadd.s32 %s131, 1
    %p135 = scmp.eq.s32.totalorder %s13, 1
    %p136 = scmp.ne.s32.totalorder %s131, %s133
    %p137 = scmp.eq.s32.totalorder %s13, 0
    %p138 = por %p136, %p137
    %p139 = scmp.ne.s32.totalorder %s131, %s133
    %p140 = scmp.eq.s32.totalorder %s18, 1
    %p141 = por %p139, %p140
    %p142 = scmp.ne.s32.totalorder %s133, %s134
    %p143 = scmp.eq.s32.totalorder %s18, 0
    %p144 = por %p142, %p143
    %p145 = scmp.ne.s32.totalorder %s133, %s134
    %p146 = scmp.eq.s32.totalorder %s19, 1
    %p147 = por %p145, %p146
    %p149 = scmp.ne.s32.totalorder %s134, %s148
    %p150 = scmp.eq.s32.totalorder %s19, 0
    %p151 = por %p149, %p150
    %s153 = sadd.s32 %s152, 1
    %p156 = scmp.eq.s32.totalorder %s13, 1
    %p157 = scmp.ne.s32.totalorder %s152, %s154
    %p158 = scmp.eq.s32.totalorder %s13, 0
    %p159 = por %p157, %p158
    %p160 = scmp.ne.s32.totalorder %s152, %s154
    %p161 = scmp.eq.s32.totalorder %s18, 1
    %p162 = por %p160, %p161
    %p163 = scmp.ne.s32.totalorder %s154, %s155
    %p164 = scmp.eq.s32.totalorder %s18, 0
    %p165 = por %p163, %p164
    %p166 = scmp.ne.s32.totalorder %s154, %s155
    %p167 = scmp.eq.s32.totalorder %s19, 1
    %p168 = por %p166, %p167
    %p170 = scmp.ne.s32.totalorder %s155, %s169
    %p171 = scmp.eq.s32.totalorder %s19, 0
    %p172 = por %p170, %p171
    %s173 = ssub.s32 %s13, %s20
    %p174 = scmp.eq.s32.totalorder %s173, 0
    %s176 = sadd.s32 %s175, 1
    %s177 = scalar_select %p174, %s175, %s176
    %p180 = pneg %p174
    %p181 = scmp.eq.s32.totalorder %s13, 1
    %p182 = por %p180, %p181
    %p183 = scmp.ne.s32.totalorder %s175, %s178
    %p184 = scmp.eq.s32.totalorder %s13, 0
    %p185 = por %p183, %p184
    %p186 = scmp.ne.s32.totalorder %s175, %s178
    %p187 = scmp.eq.s32.totalorder %s18, 1
    %p188 = por %p186, %p187
    %p189 = scmp.ne.s32.totalorder %s178, %s179
    %p190 = scmp.eq.s32.totalorder %s18, 0
    %p191 = por %p189, %p190
    %p192 = scmp.ne.s32.totalorder %s178, %s179
    %p193 = scmp.eq.s32.totalorder %s19, 1
    %p194 = por %p192, %p193
    %p196 = scmp.ne.s32.totalorder %s179, %s195
    %p197 = scmp.eq.s32.totalorder %s19, 0
    %p198 = por %p196, %p197
    %p199 = scmp.le.s32.totalorder 1, %s13
    %p200 = scmp.lt.s32.totalorder %s13, 3
    %p201 = pnand %p199, %p200
    %p202 = pneg %p201
    // Predicated region
    $region9: #{multi_task_resnet_forward.1} parent=5 // pred_check
      _
    $region10: #{multi_task_resnet_forward.1} parent=5 // pred_check_branch
      %204 = sbr.rel (%p201) target = $region12
    $region11: #{multi_task_resnet_forward.1} parent=5 // pred_region
      %s205 = ssub.s32 %s13, 1
      // Predicated region
      $region13: #{multi_task_resnet_forward.1} parent=11 // pred_check
        %p206 = pneg %p60
      $region14: #{multi_task_resnet_forward.1} parent=11 // pred_check_branch
        %208 = sbr.rel (%p206) target = $region16
      $region15: #{multi_task_resnet_forward.1} parent=11 // pred_region
        _
      $region16: #{multi_task_resnet_forward.1} parent=11 // pred_fallthru
        _
      // Predicated region
      $region17: #{multi_task_resnet_forward.1} parent=11 // pred_check
        %p209 = pneg %p81
      $region18: #{multi_task_resnet_forward.1} parent=11 // pred_check_branch
        %211 = sbr.rel (%p209) target = $region20
      $region19: #{multi_task_resnet_forward.1} parent=11 // pred_region
        _
      $region20: #{multi_task_resnet_forward.1} parent=11 // pred_fallthru
        _
      // Predicated region
      $region21: #{multi_task_resnet_forward.1} parent=11 // pred_check
        %p212 = pneg %p102
      $region22: #{multi_task_resnet_forward.1} parent=11 // pred_check_branch
        %214 = sbr.rel (%p212) target = $region24
      $region23: #{multi_task_resnet_forward.1} parent=11 // pred_region
        _
      $region24: #{multi_task_resnet_forward.1} parent=11 // pred_fallthru
        _
      // Predicated region
      $region25: #{multi_task_resnet_forward.1} parent=11 // pred_check
        %p215 = pneg %p123
      $region26: #{multi_task_resnet_forward.1} parent=11 // pred_check_branch
        %217 = sbr.rel (%p215) target = $region28
      $region27: #{multi_task_resnet_forward.1} parent=11 // pred_region
        _
      $region28: #{multi_task_resnet_forward.1} parent=11 // pred_fallthru
        _
      // Predicated region
      $region29: #{multi_task_resnet_forward.1} parent=11 // pred_check
        %p218 = pneg %p144
      $region30: #{multi_task_resnet_forward.1} parent=11 // pred_check_branch
        %220 = sbr.rel (%p218) target = $region32
      $region31: #{multi_task_resnet_forward.1} parent=11 // pred_region
        _
      $region32: #{multi_task_resnet_forward.1} parent=11 // pred_fallthru
        _
      // Predicated region
      $region33: #{multi_task_resnet_forward.1} parent=11 // pred_check
        %p221 = pneg %p165
      $region34: #{multi_task_resnet_forward.1} parent=11 // pred_check_branch
        %223 = sbr.rel (%p221) target = $region36
      $region35: #{multi_task_resnet_forward.1} parent=11 // pred_region
        _
      $region36: #{multi_task_resnet_forward.1} parent=11 // pred_fallthru
        _
    $region12: #{multi_task_resnet_forward.1} parent=5 // pred_fallthru
      _
    %p224 = scmp.lt.s32.totalorder %s13, 2
    // Predicated region
    $region37: #{multi_task_resnet_forward.1} parent=5 // pred_check
      %p225 = pneg %p224
    $region38: #{multi_task_resnet_forward.1} parent=5 // pred_check_branch
      %227 = sbr.rel (%p225) target = $region40
    $region39: #{multi_task_resnet_forward.1} parent=5 // pred_region
      // Predicated region
      $region41: #{multi_task_resnet_forward.1} parent=39 // pred_check
        %p228 = pneg %p33
      $region42: #{multi_task_resnet_forward.1} parent=39 // pred_check_branch
        %230 = sbr.rel (%p228) target = $region44
      $region43: #{multi_task_resnet_forward.1} parent=39 // pred_region
        %s231 = smul.u32 2, %s13
        %p232 = scmp.lt.s32.totalorder %s231, 3
        %s233 = scalar_select %p232, %s231, 3
        %s234 = smul.addr %s233, 8
        %s235 = smul.addr %s234, 8
        %s236 = scalar_lea.vmem %s0, %s235
        %s237 = smul.u32 2, %s13
      $region44: #{multi_task_resnet_forward.1} parent=39 // pred_fallthru
        _
    $region40: #{multi_task_resnet_forward.1} parent=5 // pred_fallthru
      _
    %p238 = scmp.le.s32.totalorder 1, %s13
    %p239 = scmp.lt.s32.totalorder %s13, 3
    %p240 = pnand %p238, %p239
    %p241 = pneg %p240
    // Predicated region
    $region45: #{multi_task_resnet_forward.1} parent=5 // pred_check
      _
    $region46: #{multi_task_resnet_forward.1} parent=5 // pred_check_branch
      %243 = sbr.rel (%p240) target = $region48
    $region47: #{multi_task_resnet_forward.1} parent=5 // pred_region
      %s244 = ssub.s32 %s13, 1
      %s245 = smul.u32 2, %s18
      %p246 = scmp.lt.s32.totalorder %s245, 3
      %s247 = scalar_select %p246, %s245, 3
      %s248 = smul.addr %s247, 8
      %s249 = smul.addr %s248, 8
      %s250 = scalar_lea.vmem %s0, %s249
      %p251 = pneg %p39
      %p252 = pneg %p36
      %p253 = pneg %p60
      %p254 = pneg %p57
      %p255 = pneg %p81
      %p256 = pneg %p78
      %p257 = pneg %p102
      %p258 = pneg %p99
      %p259 = pneg %p123
      %p260 = pneg %p120
      %p261 = pneg %p144
      %p262 = pneg %p141
      %p263 = pneg %p165
      %p264 = pneg %p162
      %p265 = pneg %p191
      %p266 = pneg %p188
      %s267 = smul.u32 2, %s18
      %p268 = scmp.lt.s32.totalorder %s267, 3
      %s269 = scalar_select %p268, %s267, 3
      %s270 = smul.addr %s269, 8
      %s271 = scalar_lea.vmem %s7, %s270
      %s272 = smul.u32 2, %s18
      %p273 = scmp.lt.s32.totalorder %s272, 3
      %s274 = scalar_select %p273, %s272, 3
      %s275 = smul.addr %s274, 8
      %s276 = smul.addr %s275, 8
      %s277 = scalar_lea.vmem %s0, %s276
      %s278 = smul.u32 2, %s18
      %s279 = smul.u32 2, %s18
      %p280 = scmp.lt.s32.totalorder %s279, 3
      %s281 = scalar_select %p280, %s279, 3
      %s282 = smul.addr %s281, 8
      %s283 = scalar_lea.vmem %s7, %s282
      %s284 = smul.u32 2, %s18
      %v286 = vld [vmem:[%s277] sm:$0xff]
      %v287 = vld [vmem:[%s277 + $0x8] sm:$0xff]
      %v288 = vld [vmem:[%s277 + $0x10] sm:$0xff]
      %v289 = vld [vmem:[%s277 + $0x18] sm:$0xff]
      %v290 = vld [vmem:[%s277 + $0x20] sm:$0xff]
      %v291 = vld [vmem:[%s277 + $0x28] sm:$0xff]
      %v292 = vld [vmem:[%s277 + $0x30] sm:$0xff]
      %v293 = vld [vmem:[%s277 + $0x38] sm:$0xff]
      %v294 = vld [vmem:[%s277 + $0x40] sm:$0xff]
      %v295 = vld [vmem:[%s277 + $0x48] sm:$0xff]
      %v296 = vld [vmem:[%s277 + $0x50] sm:$0xff]
      %v297 = vld [vmem:[%s277 + $0x58] sm:$0xff]
      %v298 = vld [vmem:[%s277 + $0x60] sm:$0xff]
      %v299 = vld [vmem:[%s277 + $0x68] sm:$0xff]
      %v300 = vld [vmem:[%s277 + $0x70] sm:$0xff]
      %v301 = vld [vmem:[%s277 + $0x78] sm:$0xff]
      %v302 = vpack.c.bf16 %v294, %v286
      %v303 = vpack.c.bf16 %v295, %v287
      %v304 = vpack.c.bf16 %v296, %v288
      %v305 = vpack.c.bf16 %v297, %v289
      %v306 = vpack.c.bf16 %v298, %v290
      %v307 = vpack.c.bf16 %v299, %v291
      %v308 = vpack.c.bf16 %v300, %v292
      %v309 = vpack.c.bf16 %v301, %v293
      %v310 = vld [vmem:[%s1] sm:$0xff]
      %v311 = vld [vmem:[%s1 + $0x8] sm:$0xff]
      %v312 = vld [vmem:[%s1 + $0x10] sm:$0xff]
      %v313 = vld [vmem:[%s1 + $0x18] sm:$0xff]
      %v314 = vld [vmem:[%s1 + $0x20] sm:$0xff]
      %v315 = vld [vmem:[%s1 + $0x28] sm:$0xff]
      %v316 = vld [vmem:[%s1 + $0x30] sm:$0xff]
      %v317 = vld [vmem:[%s1 + $0x38] sm:$0xff]
      %v318 = vld [vmem:[%s1 + $0x40] sm:$0xff]
      %v319 = vld [vmem:[%s1 + $0x48] sm:$0xff]
      %v320 = vld [vmem:[%s1 + $0x50] sm:$0xff]
      %v321 = vld [vmem:[%s1 + $0x58] sm:$0xff]
      %v322 = vld [vmem:[%s1 + $0x60] sm:$0xff]
      %v323 = vld [vmem:[%s1 + $0x68] sm:$0xff]
      %v324 = vld [vmem:[%s1 + $0x70] sm:$0xff]
      %v325 = vld [vmem:[%s1 + $0x78] sm:$0xff]
      %v326 = vld [vmem:[%s1 + $0x80] sm:$0xff]
      %v327 = vld [vmem:[%s1 + $0x88] sm:$0xff]
      %v328 = vld [vmem:[%s1 + $0x90] sm:$0xff]
      %v329 = vld [vmem:[%s1 + $0x98] sm:$0xff]
      %v330 = vld [vmem:[%s1 + $0xa0] sm:$0xff]
      %v331 = vld [vmem:[%s1 + $0xa8] sm:$0xff]
      %v332 = vld [vmem:[%s1 + $0xb0] sm:$0xff]
      %v333 = vld [vmem:[%s1 + $0xb8] sm:$0xff]
      %v334 = vld [vmem:[%s1 + $0xc0] sm:$0xff]
      %v335 = vld [vmem:[%s1 + $0xc8] sm:$0xff]
      %v336 = vld [vmem:[%s1 + $0xd0] sm:$0xff]
      %v337 = vld [vmem:[%s1 + $0xd8] sm:$0xff]
      %v338 = vld [vmem:[%s1 + $0xe0] sm:$0xff]
      %v339 = vld [vmem:[%s1 + $0xe8] sm:$0xff]
      %v340 = vld [vmem:[%s1 + $0xf0] sm:$0xff]
      %v341 = vld [vmem:[%s1 + $0xf8] sm:$0xff]
      %v342 = vld [vmem:[%s1 + $0x100] sm:$0xff]
      %v343 = vld [vmem:[%s1 + $0x108] sm:$0xff]
      %v344 = vld [vmem:[%s1 + $0x110] sm:$0xff]
      %v345 = vld [vmem:[%s1 + $0x118] sm:$0xff]
      %v346 = vld [vmem:[%s1 + $0x120] sm:$0xff]
      %v347 = vld [vmem:[%s1 + $0x128] sm:$0xff]
      %v348 = vld [vmem:[%s1 + $0x130] sm:$0xff]
      %v349 = vld [vmem:[%s1 + $0x138] sm:$0xff]
      %v350 = vld [vmem:[%s1 + $0x140] sm:$0xff]
      %v351 = vld [vmem:[%s1 + $0x148] sm:$0xff]
      %v352 = vld [vmem:[%s1 + $0x150] sm:$0xff]
      %v353 = vld [vmem:[%s1 + $0x158] sm:$0xff]
      %v354 = vld [vmem:[%s1 + $0x160] sm:$0xff]
      %v355 = vld [vmem:[%s1 + $0x168] sm:$0xff]
      %v356 = vld [vmem:[%s1 + $0x170] sm:$0xff]
      %v357 = vld [vmem:[%s1 + $0x178] sm:$0xff]
      %v358 = vld [vmem:[%s1 + $0x180] sm:$0xff]
      %v359 = vld [vmem:[%s1 + $0x188] sm:$0xff]
      %v360 = vld [vmem:[%s1 + $0x190] sm:$0xff]
      %v361 = vld [vmem:[%s1 + $0x198] sm:$0xff]
      %v362 = vld [vmem:[%s1 + $0x1a0] sm:$0xff]
      %v363 = vld [vmem:[%s1 + $0x1a8] sm:$0xff]
      %v364 = vld [vmem:[%s1 + $0x1b0] sm:$0xff]
      %v365 = vld [vmem:[%s1 + $0x1b8] sm:$0xff]
      %v366 = vld [vmem:[%s1 + $0x1c0] sm:$0xff]
      %v367 = vld [vmem:[%s1 + $0x1c8] sm:$0xff]
      %v368 = vld [vmem:[%s1 + $0x1d0] sm:$0xff]
      %v369 = vld [vmem:[%s1 + $0x1d8] sm:$0xff]
      %v370 = vld [vmem:[%s1 + $0x1e0] sm:$0xff]
      %v371 = vld [vmem:[%s1 + $0x1e8] sm:$0xff]
      %v372 = vld [vmem:[%s1 + $0x1f0] sm:$0xff]
      %v373 = vld [vmem:[%s1 + $0x1f8] sm:$0xff]
      %v374 = vld [vmem:[%s1 + $0x200] sm:$0xff]
      %v375 = vld [vmem:[%s1 + $0x208] sm:$0xff]
      %v376 = vld [vmem:[%s1 + $0x210] sm:$0xff]
      %v377 = vld [vmem:[%s1 + $0x218] sm:$0xff]
      %v378 = vld [vmem:[%s1 + $0x220] sm:$0xff]
      %v379 = vld [vmem:[%s1 + $0x228] sm:$0xff]
      %v380 = vld [vmem:[%s1 + $0x230] sm:$0xff]
      %v381 = vld [vmem:[%s1 + $0x238] sm:$0xff]
      %v382 = vld [vmem:[%s1 + $0x240] sm:$0xff]
      %v383 = vld [vmem:[%s1 + $0x248] sm:$0xff]
      %v384 = vld [vmem:[%s1 + $0x250] sm:$0xff]
      %v385 = vld [vmem:[%s1 + $0x258] sm:$0xff]
      %v386 = vld [vmem:[%s1 + $0x260] sm:$0xff]
      %v387 = vld [vmem:[%s1 + $0x268] sm:$0xff]
      %v388 = vld [vmem:[%s1 + $0x270] sm:$0xff]
      %v389 = vld [vmem:[%s1 + $0x278] sm:$0xff]
      %v390 = vld [vmem:[%s1 + $0x280] sm:$0xff]
      %v391 = vld [vmem:[%s1 + $0x288] sm:$0xff]
      %v392 = vld [vmem:[%s1 + $0x290] sm:$0xff]
      %v393 = vld [vmem:[%s1 + $0x298] sm:$0xff]
      %v394 = vld [vmem:[%s1 + $0x2a0] sm:$0xff]
      %v395 = vld [vmem:[%s1 + $0x2a8] sm:$0xff]
      %v396 = vld [vmem:[%s1 + $0x2b0] sm:$0xff]
      %v397 = vld [vmem:[%s1 + $0x2b8] sm:$0xff]
      %v398 = vld [vmem:[%s1 + $0x2c0] sm:$0xff]
      %v399 = vld [vmem:[%s1 + $0x2c8] sm:$0xff]
      %v400 = vld [vmem:[%s1 + $0x2d0] sm:$0xff]
      %v401 = vld [vmem:[%s1 + $0x2d8] sm:$0xff]
      %v402 = vld [vmem:[%s1 + $0x2e0] sm:$0xff]
      %v403 = vld [vmem:[%s1 + $0x2e8] sm:$0xff]
      %v404 = vld [vmem:[%s1 + $0x2f0] sm:$0xff]
      %v405 = vld [vmem:[%s1 + $0x2f8] sm:$0xff]
      %v406 = vld [vmem:[%s1 + $0x300] sm:$0xff]
      %v407 = vld [vmem:[%s1 + $0x308] sm:$0xff]
      %v408 = vld [vmem:[%s1 + $0x310] sm:$0xff]
      %v409 = vld [vmem:[%s1 + $0x318] sm:$0xff]
      %v410 = vld [vmem:[%s1 + $0x320] sm:$0xff]
      %v411 = vld [vmem:[%s1 + $0x328] sm:$0xff]
      %v412 = vld [vmem:[%s1 + $0x330] sm:$0xff]
      %v413 = vld [vmem:[%s1 + $0x338] sm:$0xff]
      %v414 = vld [vmem:[%s1 + $0x340] sm:$0xff]
      %v415 = vld [vmem:[%s1 + $0x348] sm:$0xff]
      %v416 = vld [vmem:[%s1 + $0x350] sm:$0xff]
      %v417 = vld [vmem:[%s1 + $0x358] sm:$0xff]
      %v418 = vld [vmem:[%s1 + $0x360] sm:$0xff]
      %v419 = vld [vmem:[%s1 + $0x368] sm:$0xff]
      %v420 = vld [vmem:[%s1 + $0x370] sm:$0xff]
      %v421 = vld [vmem:[%s1 + $0x378] sm:$0xff]
      %v422 = vld [vmem:[%s1 + $0x380] sm:$0xff]
      %v423 = vld [vmem:[%s1 + $0x388] sm:$0xff]
      %v424 = vld [vmem:[%s1 + $0x390] sm:$0xff]
      %v425 = vld [vmem:[%s1 + $0x398] sm:$0xff]
      %v426 = vld [vmem:[%s1 + $0x3a0] sm:$0xff]
      %v427 = vld [vmem:[%s1 + $0x3a8] sm:$0xff]
      %v428 = vld [vmem:[%s1 + $0x3b0] sm:$0xff]
      %v429 = vld [vmem:[%s1 + $0x3b8] sm:$0xff]
      %v430 = vld [vmem:[%s1 + $0x3c0] sm:$0xff]
      %v431 = vld [vmem:[%s1 + $0x3c8] sm:$0xff]
      %v432 = vld [vmem:[%s1 + $0x3d0] sm:$0xff]
      %v433 = vld [vmem:[%s1 + $0x3d8] sm:$0xff]
      %v434 = vld [vmem:[%s1 + $0x3e0] sm:$0xff]
      %v435 = vld [vmem:[%s1 + $0x3e8] sm:$0xff]
      %v436 = vld [vmem:[%s1 + $0x3f0] sm:$0xff]
      %v437 = vld [vmem:[%s1 + $0x3f8] sm:$0xff]
      %v438 = vld [vmem:[%s1 + $0x400] sm:$0xff]
      %v439 = vld [vmem:[%s1 + $0x408] sm:$0xff]
      %v440 = vld [vmem:[%s1 + $0x410] sm:$0xff]
      %v441 = vld [vmem:[%s1 + $0x418] sm:$0xff]
      %v442 = vld [vmem:[%s1 + $0x420] sm:$0xff]
      %v443 = vld [vmem:[%s1 + $0x428] sm:$0xff]
      %v444 = vld [vmem:[%s1 + $0x430] sm:$0xff]
      %v445 = vld [vmem:[%s1 + $0x438] sm:$0xff]
      %v446 = vld [vmem:[%s1 + $0x440] sm:$0xff]
      %v447 = vld [vmem:[%s1 + $0x448] sm:$0xff]
      %v448 = vld [vmem:[%s1 + $0x450] sm:$0xff]
      %v449 = vld [vmem:[%s1 + $0x458] sm:$0xff]
      %v450 = vld [vmem:[%s1 + $0x460] sm:$0xff]
      %v451 = vld [vmem:[%s1 + $0x468] sm:$0xff]
      %v452 = vld [vmem:[%s1 + $0x470] sm:$0xff]
      %v453 = vld [vmem:[%s1 + $0x478] sm:$0xff]
      %v454 = vld [vmem:[%s1 + $0x480] sm:$0xff]
      %v455 = vld [vmem:[%s1 + $0x488] sm:$0xff]
      %v456 = vld [vmem:[%s1 + $0x490] sm:$0xff]
      %v457 = vld [vmem:[%s1 + $0x498] sm:$0xff]
      %v458 = vld [vmem:[%s1 + $0x4a0] sm:$0xff]
      %v459 = vld [vmem:[%s1 + $0x4a8] sm:$0xff]
      %v460 = vld [vmem:[%s1 + $0x4b0] sm:$0xff]
      %v461 = vld [vmem:[%s1 + $0x4b8] sm:$0xff]
      %v462 = vld [vmem:[%s1 + $0x4c0] sm:$0xff]
      %v463 = vld [vmem:[%s1 + $0x4c8] sm:$0xff]
      %v464 = vld [vmem:[%s1 + $0x4d0] sm:$0xff]
      %v465 = vld [vmem:[%s1 + $0x4d8] sm:$0xff]
      %v466 = vld [vmem:[%s1 + $0x4e0] sm:$0xff]
      %v467 = vld [vmem:[%s1 + $0x4e8] sm:$0xff]
      %v468 = vld [vmem:[%s1 + $0x4f0] sm:$0xff]
      %v469 = vld [vmem:[%s1 + $0x4f8] sm:$0xff]
      %v470 = vld [vmem:[%s1 + $0x500] sm:$0xff]
      %v471 = vld [vmem:[%s1 + $0x508] sm:$0xff]
      %v472 = vld [vmem:[%s1 + $0x510] sm:$0xff]
      %v473 = vld [vmem:[%s1 + $0x518] sm:$0xff]
      %v474 = vld [vmem:[%s1 + $0x520] sm:$0xff]
      %v475 = vld [vmem:[%s1 + $0x528] sm:$0xff]
      %v476 = vld [vmem:[%s1 + $0x530] sm:$0xff]
      %v477 = vld [vmem:[%s1 + $0x538] sm:$0xff]
      %v478 = vld [vmem:[%s1 + $0x540] sm:$0xff]
      %v479 = vld [vmem:[%s1 + $0x548] sm:$0xff]
      %v480 = vld [vmem:[%s1 + $0x550] sm:$0xff]
      %v481 = vld [vmem:[%s1 + $0x558] sm:$0xff]
      %v482 = vld [vmem:[%s1 + $0x560] sm:$0xff]
      %v483 = vld [vmem:[%s1 + $0x568] sm:$0xff]
      %v484 = vld [vmem:[%s1 + $0x570] sm:$0xff]
      %v485 = vld [vmem:[%s1 + $0x578] sm:$0xff]
      %v486 = vld [vmem:[%s1 + $0x580] sm:$0xff]
      %v487 = vld [vmem:[%s1 + $0x588] sm:$0xff]
      %v488 = vld [vmem:[%s1 + $0x590] sm:$0xff]
      %v489 = vld [vmem:[%s1 + $0x598] sm:$0xff]
      %v490 = vld [vmem:[%s1 + $0x5a0] sm:$0xff]
      %v491 = vld [vmem:[%s1 + $0x5a8] sm:$0xff]
      %v492 = vld [vmem:[%s1 + $0x5b0] sm:$0xff]
      %v493 = vld [vmem:[%s1 + $0x5b8] sm:$0xff]
      %v494 = vld [vmem:[%s1 + $0x5c0] sm:$0xff]
      %v495 = vld [vmem:[%s1 + $0x5c8] sm:$0xff]
      %v496 = vld [vmem:[%s1 + $0x5d0] sm:$0xff]
      %v497 = vld [vmem:[%s1 + $0x5d8] sm:$0xff]
      %v498 = vld [vmem:[%s1 + $0x5e0] sm:$0xff]
      %v499 = vld [vmem:[%s1 + $0x5e8] sm:$0xff]
      %v500 = vld [vmem:[%s1 + $0x5f0] sm:$0xff]
      %v501 = vld [vmem:[%s1 + $0x5f8] sm:$0xff]
      %v502 = vld [vmem:[%s1 + $0x600] sm:$0xff]
      %v503 = vld [vmem:[%s1 + $0x608] sm:$0xff]
      %v504 = vld [vmem:[%s1 + $0x610] sm:$0xff]
      %v505 = vld [vmem:[%s1 + $0x618] sm:$0xff]
      %v506 = vld [vmem:[%s1 + $0x620] sm:$0xff]
      %v507 = vld [vmem:[%s1 + $0x628] sm:$0xff]
      %v508 = vld [vmem:[%s1 + $0x630] sm:$0xff]
      %v509 = vld [vmem:[%s1 + $0x638] sm:$0xff]
      %v510 = vld [vmem:[%s1 + $0x640] sm:$0xff]
      %v511 = vld [vmem:[%s1 + $0x648] sm:$0xff]
      %v512 = vld [vmem:[%s1 + $0x650] sm:$0xff]
      %v513 = vld [vmem:[%s1 + $0x658] sm:$0xff]
      %v514 = vld [vmem:[%s1 + $0x660] sm:$0xff]
      %v515 = vld [vmem:[%s1 + $0x668] sm:$0xff]
      %v516 = vld [vmem:[%s1 + $0x670] sm:$0xff]
      %v517 = vld [vmem:[%s1 + $0x678] sm:$0xff]
      %v518 = vld [vmem:[%s1 + $0x680] sm:$0xff]
      %v519 = vld [vmem:[%s1 + $0x688] sm:$0xff]
      %v520 = vld [vmem:[%s1 + $0x690] sm:$0xff]
      %v521 = vld [vmem:[%s1 + $0x698] sm:$0xff]
      %v522 = vld [vmem:[%s1 + $0x6a0] sm:$0xff]
      %v523 = vld [vmem:[%s1 + $0x6a8] sm:$0xff]
      %v524 = vld [vmem:[%s1 + $0x6b0] sm:$0xff]
      %v525 = vld [vmem:[%s1 + $0x6b8] sm:$0xff]
      %v526 = vld [vmem:[%s1 + $0x6c0] sm:$0xff]
      %v527 = vld [vmem:[%s1 + $0x6c8] sm:$0xff]
      %v528 = vld [vmem:[%s1 + $0x6d0] sm:$0xff]
      %v529 = vld [vmem:[%s1 + $0x6d8] sm:$0xff]
      %v530 = vld [vmem:[%s1 + $0x6e0] sm:$0xff]
      %v531 = vld [vmem:[%s1 + $0x6e8] sm:$0xff]
      %v532 = vld [vmem:[%s1 + $0x6f0] sm:$0xff]
      %v533 = vld [vmem:[%s1 + $0x6f8] sm:$0xff]
      %v534 = vld [vmem:[%s1 + $0x700] sm:$0xff]
      %v535 = vld [vmem:[%s1 + $0x708] sm:$0xff]
      %v536 = vld [vmem:[%s1 + $0x710] sm:$0xff]
      %v537 = vld [vmem:[%s1 + $0x718] sm:$0xff]
      %v538 = vld [vmem:[%s1 + $0x720] sm:$0xff]
      %v539 = vld [vmem:[%s1 + $0x728] sm:$0xff]
      %v540 = vld [vmem:[%s1 + $0x730] sm:$0xff]
      %v541 = vld [vmem:[%s1 + $0x738] sm:$0xff]
      %v542 = vld [vmem:[%s1 + $0x740] sm:$0xff]
      %v543 = vld [vmem:[%s1 + $0x748] sm:$0xff]
      %v544 = vld [vmem:[%s1 + $0x750] sm:$0xff]
      %v545 = vld [vmem:[%s1 + $0x758] sm:$0xff]
      %v546 = vld [vmem:[%s1 + $0x760] sm:$0xff]
      %v547 = vld [vmem:[%s1 + $0x768] sm:$0xff]
      %v548 = vld [vmem:[%s1 + $0x770] sm:$0xff]
      %v549 = vld [vmem:[%s1 + $0x778] sm:$0xff]
      %v550 = vld [vmem:[%s1 + $0x780] sm:$0xff]
      %v551 = vld [vmem:[%s1 + $0x788] sm:$0xff]
      %v552 = vld [vmem:[%s1 + $0x790] sm:$0xff]
      %v553 = vld [vmem:[%s1 + $0x798] sm:$0xff]
      %v554 = vld [vmem:[%s1 + $0x7a0] sm:$0xff]
      %v555 = vld [vmem:[%s1 + $0x7a8] sm:$0xff]
      %v556 = vld [vmem:[%s1 + $0x7b0] sm:$0xff]
      %v557 = vld [vmem:[%s1 + $0x7b8] sm:$0xff]
      %v558 = vld [vmem:[%s1 + $0x7c0] sm:$0xff]
      %v559 = vld [vmem:[%s1 + $0x7c8] sm:$0xff]
      %v560 = vld [vmem:[%s1 + $0x7d0] sm:$0xff]
      %v561 = vld [vmem:[%s1 + $0x7d8] sm:$0xff]
      %v562 = vld [vmem:[%s1 + $0x7e0] sm:$0xff]
      %v563 = vld [vmem:[%s1 + $0x7e8] sm:$0xff]
      %v564 = vld [vmem:[%s1 + $0x7f0] sm:$0xff]
      %v565 = vld [vmem:[%s1 + $0x7f8] sm:$0xff]
      %v566 = vld [vmem:[%s2] sm:$0xf]
      %v568 = vlaneseq
      %v569 = vshrl.u32 %v568, 7
      %v570 = vsub.s32 0, %v569
      %v571 = vrot.slane %v566, %v570
      %v572 = vlaneseq
      %v573 = vshrl.u32 %v572, 7
      %v574 = vsub.s32 1, %v573
      %v575 = vrot.slane %v566, %v574
      %v576 = vlaneseq
      %v577 = vshrl.u32 %v576, 7
      %v578 = vsub.s32 2, %v577
      %v579 = vrot.slane %v566, %v578
      %v580 = vlaneseq
      %v581 = vshrl.u32 %v580, 7
      %v582 = vsub.s32 3, %v581
      %v583 = vrot.slane %v566, %v582
      %v844 = vunpack.c.l.b16 %v310
      %v845 = vunpack.c.h.b16 %v310
      %v846 = vunpack.c.l.b16 %v311
      %v847 = vunpack.c.h.b16 %v311
      %v848 = vunpack.c.l.b16 %v312
      %v849 = vunpack.c.h.b16 %v312
      %v850 = vunpack.c.l.b16 %v313
      %v851 = vunpack.c.h.b16 %v313
      %v852 = vunpack.c.l.b16 %v314
      %v853 = vunpack.c.h.b16 %v314
      %v854 = vunpack.c.l.b16 %v315
      %v855 = vunpack.c.h.b16 %v315
      %v856 = vunpack.c.l.b16 %v316
      %v857 = vunpack.c.h.b16 %v316
      %v858 = vunpack.c.l.b16 %v317
      %v859 = vunpack.c.h.b16 %v317
      %v860 = vunpack.c.l.b16 %v318
      %v861 = vunpack.c.h.b16 %v318
      %v862 = vunpack.c.l.b16 %v319
      %v863 = vunpack.c.h.b16 %v319
      %v864 = vunpack.c.l.b16 %v320
      %v865 = vunpack.c.h.b16 %v320
      %v866 = vunpack.c.l.b16 %v321
      %v867 = vunpack.c.h.b16 %v321
      %v868 = vunpack.c.l.b16 %v322
      %v869 = vunpack.c.h.b16 %v322
      %v870 = vunpack.c.l.b16 %v323
      %v871 = vunpack.c.h.b16 %v323
      %v872 = vunpack.c.l.b16 %v324
      %v873 = vunpack.c.h.b16 %v324
      %v874 = vunpack.c.l.b16 %v325
      %v875 = vunpack.c.h.b16 %v325
      %v876 = vunpack.c.l.b16 %v326
      %v877 = vunpack.c.h.b16 %v326
      %v878 = vunpack.c.l.b16 %v327
      %v879 = vunpack.c.h.b16 %v327
      %v880 = vunpack.c.l.b16 %v328
      %v881 = vunpack.c.h.b16 %v328
      %v882 = vunpack.c.l.b16 %v329
      %v883 = vunpack.c.h.b16 %v329
      %v884 = vunpack.c.l.b16 %v330
      %v885 = vunpack.c.h.b16 %v330
      %v886 = vunpack.c.l.b16 %v331
      %v887 = vunpack.c.h.b16 %v331
      %v888 = vunpack.c.l.b16 %v332
      %v889 = vunpack.c.h.b16 %v332
      %v890 = vunpack.c.l.b16 %v333
      %v891 = vunpack.c.h.b16 %v333
      %v892 = vunpack.c.l.b16 %v334
      %v893 = vunpack.c.h.b16 %v334
      %v894 = vunpack.c.l.b16 %v335
      %v895 = vunpack.c.h.b16 %v335
      %v896 = vunpack.c.l.b16 %v336
      %v897 = vunpack.c.h.b16 %v336
      %v898 = vunpack.c.l.b16 %v337
      %v899 = vunpack.c.h.b16 %v337
      %v900 = vunpack.c.l.b16 %v338
      %v901 = vunpack.c.h.b16 %v338
      %v902 = vunpack.c.l.b16 %v339
      %v903 = vunpack.c.h.b16 %v339
      %v904 = vunpack.c.l.b16 %v340
      %v905 = vunpack.c.h.b16 %v340
      %v906 = vunpack.c.l.b16 %v341
      %v907 = vunpack.c.h.b16 %v341
      %v908 = vunpack.c.l.b16 %v342
      %v909 = vunpack.c.h.b16 %v342
      %v910 = vunpack.c.l.b16 %v343
      %v911 = vunpack.c.h.b16 %v343
      %v912 = vunpack.c.l.b16 %v344
      %v913 = vunpack.c.h.b16 %v344
      %v914 = vunpack.c.l.b16 %v345
      %v915 = vunpack.c.h.b16 %v345
      %v916 = vunpack.c.l.b16 %v346
      %v917 = vunpack.c.h.b16 %v346
      %v918 = vunpack.c.l.b16 %v347
      %v919 = vunpack.c.h.b16 %v347
      %v920 = vunpack.c.l.b16 %v348
      %v921 = vunpack.c.h.b16 %v348
      %v922 = vunpack.c.l.b16 %v349
      %v923 = vunpack.c.h.b16 %v349
      %v924 = vunpack.c.l.b16 %v350
      %v925 = vunpack.c.h.b16 %v350
      %v926 = vunpack.c.l.b16 %v351
      %v927 = vunpack.c.h.b16 %v351
      %v928 = vunpack.c.l.b16 %v352
      %v929 = vunpack.c.h.b16 %v352
      %v930 = vunpack.c.l.b16 %v353
      %v931 = vunpack.c.h.b16 %v353
      %v932 = vunpack.c.l.b16 %v354
      %v933 = vunpack.c.h.b16 %v354
      %v934 = vunpack.c.l.b16 %v355
      %v935 = vunpack.c.h.b16 %v355
      %v936 = vunpack.c.l.b16 %v356
      %v937 = vunpack.c.h.b16 %v356
      %v938 = vunpack.c.l.b16 %v357
      %v939 = vunpack.c.h.b16 %v357
      %v940 = vunpack.c.l.b16 %v358
      %v941 = vunpack.c.h.b16 %v358
      %v942 = vunpack.c.l.b16 %v359
      %v943 = vunpack.c.h.b16 %v359
      %v944 = vunpack.c.l.b16 %v360
      %v945 = vunpack.c.h.b16 %v360
      %v946 = vunpack.c.l.b16 %v361
      %v947 = vunpack.c.h.b16 %v361
      %v948 = vunpack.c.l.b16 %v362
      %v949 = vunpack.c.h.b16 %v362
      %v950 = vunpack.c.l.b16 %v363
      %v951 = vunpack.c.h.b16 %v363
      %v952 = vunpack.c.l.b16 %v364
      %v953 = vunpack.c.h.b16 %v364
      %v954 = vunpack.c.l.b16 %v365
      %v955 = vunpack.c.h.b16 %v365
      %v956 = vunpack.c.l.b16 %v366
      %v957 = vunpack.c.h.b16 %v366
      %v958 = vunpack.c.l.b16 %v367
      %v959 = vunpack.c.h.b16 %v367
      %v960 = vunpack.c.l.b16 %v368
      %v961 = vunpack.c.h.b16 %v368
      %v962 = vunpack.c.l.b16 %v369
      %v963 = vunpack.c.h.b16 %v369
      %v964 = vunpack.c.l.b16 %v370
      %v965 = vunpack.c.h.b16 %v370
      %v966 = vunpack.c.l.b16 %v371
      %v967 = vunpack.c.h.b16 %v371
      %v968 = vunpack.c.l.b16 %v372
      %v969 = vunpack.c.h.b16 %v372
      %v970 = vunpack.c.l.b16 %v373
      %v971 = vunpack.c.h.b16 %v373
      %v972 = vunpack.c.l.b16 %v374
      %v973 = vunpack.c.h.b16 %v374
      %v974 = vunpack.c.l.b16 %v375
      %v975 = vunpack.c.h.b16 %v375
      %v976 = vunpack.c.l.b16 %v376
      %v977 = vunpack.c.h.b16 %v376
      %v978 = vunpack.c.l.b16 %v377
      %v979 = vunpack.c.h.b16 %v377
      %v980 = vunpack.c.l.b16 %v378
      %v981 = vunpack.c.h.b16 %v378
      %v982 = vunpack.c.l.b16 %v379
      %v983 = vunpack.c.h.b16 %v379
      %v984 = vunpack.c.l.b16 %v380
      %v985 = vunpack.c.h.b16 %v380
      %v986 = vunpack.c.l.b16 %v381
      %v987 = vunpack.c.h.b16 %v381
      %v988 = vunpack.c.l.b16 %v382
      %v989 = vunpack.c.h.b16 %v382
      %v990 = vunpack.c.l.b16 %v383
      %v991 = vunpack.c.h.b16 %v383
      %v992 = vunpack.c.l.b16 %v384
      %v993 = vunpack.c.h.b16 %v384
      %v994 = vunpack.c.l.b16 %v385
      %v995 = vunpack.c.h.b16 %v385
      %v996 = vunpack.c.l.b16 %v386
      %v997 = vunpack.c.h.b16 %v386
      %v998 = vunpack.c.l.b16 %v387
      %v999 = vunpack.c.h.b16 %v387
      %v1000 = vunpack.c.l.b16 %v388
      %v1001 = vunpack.c.h.b16 %v388
      %v1002 = vunpack.c.l.b16 %v389
      %v1003 = vunpack.c.h.b16 %v389
      %v1004 = vunpack.c.l.b16 %v390
      %v1005 = vunpack.c.h.b16 %v390
      %v1006 = vunpack.c.l.b16 %v391
      %v1007 = vunpack.c.h.b16 %v391
      %v1008 = vunpack.c.l.b16 %v392
      %v1009 = vunpack.c.h.b16 %v392
      %v1010 = vunpack.c.l.b16 %v393
      %v1011 = vunpack.c.h.b16 %v393
      %v1012 = vunpack.c.l.b16 %v394
      %v1013 = vunpack.c.h.b16 %v394
      %v1014 = vunpack.c.l.b16 %v395
      %v1015 = vunpack.c.h.b16 %v395
      %v1016 = vunpack.c.l.b16 %v396
      %v1017 = vunpack.c.h.b16 %v396
      %v1018 = vunpack.c.l.b16 %v397
      %v1019 = vunpack.c.h.b16 %v397
      %v1020 = vunpack.c.l.b16 %v398
      %v1021 = vunpack.c.h.b16 %v398
      %v1022 = vunpack.c.l.b16 %v399
      %v1023 = vunpack.c.h.b16 %v399
      %v1024 = vunpack.c.l.b16 %v400
      %v1025 = vunpack.c.h.b16 %v400
      %v1026 = vunpack.c.l.b16 %v401
      %v1027 = vunpack.c.h.b16 %v401
      %v1028 = vunpack.c.l.b16 %v402
      %v1029 = vunpack.c.h.b16 %v402
      %v1030 = vunpack.c.l.b16 %v403
      %v1031 = vunpack.c.h.b16 %v403
      %v1032 = vunpack.c.l.b16 %v404
      %v1033 = vunpack.c.h.b16 %v404
      %v1034 = vunpack.c.l.b16 %v405
      %v1035 = vunpack.c.h.b16 %v405
      %v1036 = vunpack.c.l.b16 %v406
      %v1037 = vunpack.c.h.b16 %v406
      %v1038 = vunpack.c.l.b16 %v407
      %v1039 = vunpack.c.h.b16 %v407
      %v1040 = vunpack.c.l.b16 %v408
      %v1041 = vunpack.c.h.b16 %v408
      %v1042 = vunpack.c.l.b16 %v409
      %v1043 = vunpack.c.h.b16 %v409
      %v1044 = vunpack.c.l.b16 %v410
      %v1045 = vunpack.c.h.b16 %v410
      %v1046 = vunpack.c.l.b16 %v411
      %v1047 = vunpack.c.h.b16 %v411
      %v1048 = vunpack.c.l.b16 %v412
      %v1049 = vunpack.c.h.b16 %v412
      %v1050 = vunpack.c.l.b16 %v413
      %v1051 = vunpack.c.h.b16 %v413
      %v1052 = vunpack.c.l.b16 %v414
      %v1053 = vunpack.c.h.b16 %v414
      %v1054 = vunpack.c.l.b16 %v415
      %v1055 = vunpack.c.h.b16 %v415
      %v1056 = vunpack.c.l.b16 %v416
      %v1057 = vunpack.c.h.b16 %v416
      %v1058 = vunpack.c.l.b16 %v417
      %v1059 = vunpack.c.h.b16 %v417
      %v1060 = vunpack.c.l.b16 %v418
      %v1061 = vunpack.c.h.b16 %v418
      %v1062 = vunpack.c.l.b16 %v419
      %v1063 = vunpack.c.h.b16 %v419
      %v1064 = vunpack.c.l.b16 %v420
      %v1065 = vunpack.c.h.b16 %v420
      %v1066 = vunpack.c.l.b16 %v421
      %v1067 = vunpack.c.h.b16 %v421
      %v1068 = vunpack.c.l.b16 %v422
      %v1069 = vunpack.c.h.b16 %v422
      %v1070 = vunpack.c.l.b16 %v423
      %v1071 = vunpack.c.h.b16 %v423
      %v1072 = vunpack.c.l.b16 %v424
      %v1073 = vunpack.c.h.b16 %v424
      %v1074 = vunpack.c.l.b16 %v425
      %v1075 = vunpack.c.h.b16 %v425
      %v1076 = vunpack.c.l.b16 %v426
      %v1077 = vunpack.c.h.b16 %v426
      %v1078 = vunpack.c.l.b16 %v427
      %v1079 = vunpack.c.h.b16 %v427
      %v1080 = vunpack.c.l.b16 %v428
      %v1081 = vunpack.c.h.b16 %v428
      %v1082 = vunpack.c.l.b16 %v429
      %v1083 = vunpack.c.h.b16 %v429
      %v1084 = vunpack.c.l.b16 %v430
      %v1085 = vunpack.c.h.b16 %v430
      %v1086 = vunpack.c.l.b16 %v431
      %v1087 = vunpack.c.h.b16 %v431
      %v1088 = vunpack.c.l.b16 %v432
      %v1089 = vunpack.c.h.b16 %v432
      %v1090 = vunpack.c.l.b16 %v433
      %v1091 = vunpack.c.h.b16 %v433
      %v1092 = vunpack.c.l.b16 %v434
      %v1093 = vunpack.c.h.b16 %v434
      %v1094 = vunpack.c.l.b16 %v435
      %v1095 = vunpack.c.h.b16 %v435
      %v1096 = vunpack.c.l.b16 %v436
      %v1097 = vunpack.c.h.b16 %v436
      %v1098 = vunpack.c.l.b16 %v437
      %v1099 = vunpack.c.h.b16 %v437
      %v1100 = vunpack.c.l.b16 %v438
      %v1101 = vunpack.c.h.b16 %v438
      %v1102 = vunpack.c.l.b16 %v439
      %v1103 = vunpack.c.h.b16 %v439
      %v1104 = vunpack.c.l.b16 %v440
      %v1105 = vunpack.c.h.b16 %v440
      %v1106 = vunpack.c.l.b16 %v441
      %v1107 = vunpack.c.h.b16 %v441
      %v1108 = vunpack.c.l.b16 %v442
      %v1109 = vunpack.c.h.b16 %v442
      %v1110 = vunpack.c.l.b16 %v443
      %v1111 = vunpack.c.h.b16 %v443
      %v1112 = vunpack.c.l.b16 %v444
      %v1113 = vunpack.c.h.b16 %v444
      %v1114 = vunpack.c.l.b16 %v445
      %v1115 = vunpack.c.h.b16 %v445
      %v1116 = vunpack.c.l.b16 %v446
      %v1117 = vunpack.c.h.b16 %v446
      %v1118 = vunpack.c.l.b16 %v447
      %v1119 = vunpack.c.h.b16 %v447
      %v1120 = vunpack.c.l.b16 %v448
      %v1121 = vunpack.c.h.b16 %v448
      %v1122 = vunpack.c.l.b16 %v449
      %v1123 = vunpack.c.h.b16 %v449
      %v1124 = vunpack.c.l.b16 %v450
      %v1125 = vunpack.c.h.b16 %v450
      %v1126 = vunpack.c.l.b16 %v451
      %v1127 = vunpack.c.h.b16 %v451
      %v1128 = vunpack.c.l.b16 %v452
      %v1129 = vunpack.c.h.b16 %v452
      %v1130 = vunpack.c.l.b16 %v453
      %v1131 = vunpack.c.h.b16 %v453
      %v1132 = vunpack.c.l.b16 %v454
      %v1133 = vunpack.c.h.b16 %v454
      %v1134 = vunpack.c.l.b16 %v455
      %v1135 = vunpack.c.h.b16 %v455
      %v1136 = vunpack.c.l.b16 %v456
      %v1137 = vunpack.c.h.b16 %v456
      %v1138 = vunpack.c.l.b16 %v457
      %v1139 = vunpack.c.h.b16 %v457
      %v1140 = vunpack.c.l.b16 %v458
      %v1141 = vunpack.c.h.b16 %v458
      %v1142 = vunpack.c.l.b16 %v459
      %v1143 = vunpack.c.h.b16 %v459
      %v1144 = vunpack.c.l.b16 %v460
      %v1145 = vunpack.c.h.b16 %v460
      %v1146 = vunpack.c.l.b16 %v461
      %v1147 = vunpack.c.h.b16 %v461
      %v1148 = vunpack.c.l.b16 %v462
      %v1149 = vunpack.c.h.b16 %v462
      %v1150 = vunpack.c.l.b16 %v463
      %v1151 = vunpack.c.h.b16 %v463
      %v1152 = vunpack.c.l.b16 %v464
      %v1153 = vunpack.c.h.b16 %v464
      %v1154 = vunpack.c.l.b16 %v465
      %v1155 = vunpack.c.h.b16 %v465
      %v1156 = vunpack.c.l.b16 %v466
      %v1157 = vunpack.c.h.b16 %v466
      %v1158 = vunpack.c.l.b16 %v467
      %v1159 = vunpack.c.h.b16 %v467
      %v1160 = vunpack.c.l.b16 %v468
      %v1161 = vunpack.c.h.b16 %v468
      %v1162 = vunpack.c.l.b16 %v469
      %v1163 = vunpack.c.h.b16 %v469
      %v1164 = vunpack.c.l.b16 %v470
      %v1165 = vunpack.c.h.b16 %v470
      %v1166 = vunpack.c.l.b16 %v471
      %v1167 = vunpack.c.h.b16 %v471
      %v1168 = vunpack.c.l.b16 %v472
      %v1169 = vunpack.c.h.b16 %v472
      %v1170 = vunpack.c.l.b16 %v473
      %v1171 = vunpack.c.h.b16 %v473
      %v1172 = vunpack.c.l.b16 %v474
      %v1173 = vunpack.c.h.b16 %v474
      %v1174 = vunpack.c.l.b16 %v475
      %v1175 = vunpack.c.h.b16 %v475
      %v1176 = vunpack.c.l.b16 %v476
      %v1177 = vunpack.c.h.b16 %v476
      %v1178 = vunpack.c.l.b16 %v477
      %v1179 = vunpack.c.h.b16 %v477
      %v1180 = vunpack.c.l.b16 %v478
      %v1181 = vunpack.c.h.b16 %v478
      %v1182 = vunpack.c.l.b16 %v479
      %v1183 = vunpack.c.h.b16 %v479
      %v1184 = vunpack.c.l.b16 %v480
      %v1185 = vunpack.c.h.b16 %v480
      %v1186 = vunpack.c.l.b16 %v481
      %v1187 = vunpack.c.h.b16 %v481
      %v1188 = vunpack.c.l.b16 %v482
      %v1189 = vunpack.c.h.b16 %v482
      %v1190 = vunpack.c.l.b16 %v483
      %v1191 = vunpack.c.h.b16 %v483
      %v1192 = vunpack.c.l.b16 %v484
      %v1193 = vunpack.c.h.b16 %v484
      %v1194 = vunpack.c.l.b16 %v485
      %v1195 = vunpack.c.h.b16 %v485
      %v1196 = vunpack.c.l.b16 %v486
      %v1197 = vunpack.c.h.b16 %v486
      %v1198 = vunpack.c.l.b16 %v487
      %v1199 = vunpack.c.h.b16 %v487
      %v1200 = vunpack.c.l.b16 %v488
      %v1201 = vunpack.c.h.b16 %v488
      %v1202 = vunpack.c.l.b16 %v489
      %v1203 = vunpack.c.h.b16 %v489
      %v1204 = vunpack.c.l.b16 %v490
      %v1205 = vunpack.c.h.b16 %v490
      %v1206 = vunpack.c.l.b16 %v491
      %v1207 = vunpack.c.h.b16 %v491
      %v1208 = vunpack.c.l.b16 %v492
      %v1209 = vunpack.c.h.b16 %v492
      %v1210 = vunpack.c.l.b16 %v493
      %v1211 = vunpack.c.h.b16 %v493
      %v1212 = vunpack.c.l.b16 %v494
      %v1213 = vunpack.c.h.b16 %v494
      %v1214 = vunpack.c.l.b16 %v495
      %v1215 = vunpack.c.h.b16 %v495
      %v1216 = vunpack.c.l.b16 %v496
      %v1217 = vunpack.c.h.b16 %v496
      %v1218 = vunpack.c.l.b16 %v497
      %v1219 = vunpack.c.h.b16 %v497
      %v1220 = vunpack.c.l.b16 %v498
      %v1221 = vunpack.c.h.b16 %v498
      %v1222 = vunpack.c.l.b16 %v499
      %v1223 = vunpack.c.h.b16 %v499
      %v1224 = vunpack.c.l.b16 %v500
      %v1225 = vunpack.c.h.b16 %v500
      %v1226 = vunpack.c.l.b16 %v501
      %v1227 = vunpack.c.h.b16 %v501
      %v1228 = vunpack.c.l.b16 %v502
      %v1229 = vunpack.c.h.b16 %v502
      %v1230 = vunpack.c.l.b16 %v503
      %v1231 = vunpack.c.h.b16 %v503
      %v1232 = vunpack.c.l.b16 %v504
      %v1233 = vunpack.c.h.b16 %v504
      %v1234 = vunpack.c.l.b16 %v505
      %v1235 = vunpack.c.h.b16 %v505
      %v1236 = vunpack.c.l.b16 %v506
      %v1237 = vunpack.c.h.b16 %v506
      %v1238 = vunpack.c.l.b16 %v507
      %v1239 = vunpack.c.h.b16 %v507
      %v1240 = vunpack.c.l.b16 %v508
      %v1241 = vunpack.c.h.b16 %v508
      %v1242 = vunpack.c.l.b16 %v509
      %v1243 = vunpack.c.h.b16 %v509
      %v1244 = vunpack.c.l.b16 %v510
      %v1245 = vunpack.c.h.b16 %v510
      %v1246 = vunpack.c.l.b16 %v511
      %v1247 = vunpack.c.h.b16 %v511
      %v1248 = vunpack.c.l.b16 %v512
      %v1249 = vunpack.c.h.b16 %v512
      %v1250 = vunpack.c.l.b16 %v513
      %v1251 = vunpack.c.h.b16 %v513
      %v1252 = vunpack.c.l.b16 %v514
      %v1253 = vunpack.c.h.b16 %v514
      %v1254 = vunpack.c.l.b16 %v515
      %v1255 = vunpack.c.h.b16 %v515
      %v1256 = vunpack.c.l.b16 %v516
      %v1257 = vunpack.c.h.b16 %v516
      %v1258 = vunpack.c.l.b16 %v517
      %v1259 = vunpack.c.h.b16 %v517
      %v1260 = vunpack.c.l.b16 %v518
      %v1261 = vunpack.c.h.b16 %v518
      %v1262 = vunpack.c.l.b16 %v519
      %v1263 = vunpack.c.h.b16 %v519
      %v1264 = vunpack.c.l.b16 %v520
      %v1265 = vunpack.c.h.b16 %v520
      %v1266 = vunpack.c.l.b16 %v521
      %v1267 = vunpack.c.h.b16 %v521
      %v1268 = vunpack.c.l.b16 %v522
      %v1269 = vunpack.c.h.b16 %v522
      %v1270 = vunpack.c.l.b16 %v523
      %v1271 = vunpack.c.h.b16 %v523
      %v1272 = vunpack.c.l.b16 %v524
      %v1273 = vunpack.c.h.b16 %v524
      %v1274 = vunpack.c.l.b16 %v525
      %v1275 = vunpack.c.h.b16 %v525
      %v1276 = vunpack.c.l.b16 %v526
      %v1277 = vunpack.c.h.b16 %v526
      %v1278 = vunpack.c.l.b16 %v527
      %v1279 = vunpack.c.h.b16 %v527
      %v1280 = vunpack.c.l.b16 %v528
      %v1281 = vunpack.c.h.b16 %v528
      %v1282 = vunpack.c.l.b16 %v529
      %v1283 = vunpack.c.h.b16 %v529
      %v1284 = vunpack.c.l.b16 %v530
      %v1285 = vunpack.c.h.b16 %v530
      %v1286 = vunpack.c.l.b16 %v531
      %v1287 = vunpack.c.h.b16 %v531
      %v1288 = vunpack.c.l.b16 %v532
      %v1289 = vunpack.c.h.b16 %v532
      %v1290 = vunpack.c.l.b16 %v533
      %v1291 = vunpack.c.h.b16 %v533
      %v1292 = vunpack.c.l.b16 %v534
      %v1293 = vunpack.c.h.b16 %v534
      %v1294 = vunpack.c.l.b16 %v535
      %v1295 = vunpack.c.h.b16 %v535
      %v1296 = vunpack.c.l.b16 %v536
      %v1297 = vunpack.c.h.b16 %v536
      %v1298 = vunpack.c.l.b16 %v537
      %v1299 = vunpack.c.h.b16 %v537
      %v1300 = vunpack.c.l.b16 %v538
      %v1301 = vunpack.c.h.b16 %v538
      %v1302 = vunpack.c.l.b16 %v539
      %v1303 = vunpack.c.h.b16 %v539
      %v1304 = vunpack.c.l.b16 %v540
      %v1305 = vunpack.c.h.b16 %v540
      %v1306 = vunpack.c.l.b16 %v541
      %v1307 = vunpack.c.h.b16 %v541
      %v1308 = vunpack.c.l.b16 %v542
      %v1309 = vunpack.c.h.b16 %v542
      %v1310 = vunpack.c.l.b16 %v543
      %v1311 = vunpack.c.h.b16 %v543
      %v1312 = vunpack.c.l.b16 %v544
      %v1313 = vunpack.c.h.b16 %v544
      %v1314 = vunpack.c.l.b16 %v545
      %v1315 = vunpack.c.h.b16 %v545
      %v1316 = vunpack.c.l.b16 %v546
      %v1317 = vunpack.c.h.b16 %v546
      %v1318 = vunpack.c.l.b16 %v547
      %v1319 = vunpack.c.h.b16 %v547
      %v1320 = vunpack.c.l.b16 %v548
      %v1321 = vunpack.c.h.b16 %v548
      %v1322 = vunpack.c.l.b16 %v549
      %v1323 = vunpack.c.h.b16 %v549
      %v1324 = vunpack.c.l.b16 %v550
      %v1325 = vunpack.c.h.b16 %v550
      %v1326 = vunpack.c.l.b16 %v551
      %v1327 = vunpack.c.h.b16 %v551
      %v1328 = vunpack.c.l.b16 %v552
      %v1329 = vunpack.c.h.b16 %v552
      %v1330 = vunpack.c.l.b16 %v553
      %v1331 = vunpack.c.h.b16 %v553
      %v1332 = vunpack.c.l.b16 %v554
      %v1333 = vunpack.c.h.b16 %v554
      %v1334 = vunpack.c.l.b16 %v555
      %v1335 = vunpack.c.h.b16 %v555
      %v1336 = vunpack.c.l.b16 %v556
      %v1337 = vunpack.c.h.b16 %v556
      %v1338 = vunpack.c.l.b16 %v557
      %v1339 = vunpack.c.h.b16 %v557
      %v1340 = vunpack.c.l.b16 %v558
      %v1341 = vunpack.c.h.b16 %v558
      %v1342 = vunpack.c.l.b16 %v559
      %v1343 = vunpack.c.h.b16 %v559
      %v1344 = vunpack.c.l.b16 %v560
      %v1345 = vunpack.c.h.b16 %v560
      %v1346 = vunpack.c.l.b16 %v561
      %v1347 = vunpack.c.h.b16 %v561
      %v1348 = vunpack.c.l.b16 %v562
      %v1349 = vunpack.c.h.b16 %v562
      %v1350 = vunpack.c.l.b16 %v563
      %v1351 = vunpack.c.h.b16 %v563
      %v1352 = vunpack.c.l.b16 %v564
      %v1353 = vunpack.c.h.b16 %v564
      %v1354 = vunpack.c.l.b16 %v565
      %v1355 = vunpack.c.h.b16 %v565
      %v1356 = vpack.c.b16 %v848, %v844
      %v1357 = vpack.c.b16 %v849, %v845
      %v1358 = vpack.c.b16 %v850, %v846
      %v1359 = vpack.c.b16 %v851, %v847
      %v1360 = vpack.c.b16 %v856, %v852
      %v1361 = vpack.c.b16 %v857, %v853
      %v1362 = vpack.c.b16 %v858, %v854
      %v1363 = vpack.c.b16 %v859, %v855
      %v1364 = vpack.c.b16 %v864, %v860
      %v1365 = vpack.c.b16 %v865, %v861
      %v1366 = vpack.c.b16 %v866, %v862
      %v1367 = vpack.c.b16 %v867, %v863
      %v1368 = vpack.c.b16 %v872, %v868
      %v1369 = vpack.c.b16 %v873, %v869
      %v1370 = vpack.c.b16 %v874, %v870
      %v1371 = vpack.c.b16 %v875, %v871
      %v1372 = vpack.c.b16 %v880, %v876
      %v1373 = vpack.c.b16 %v881, %v877
      %v1374 = vpack.c.b16 %v882, %v878
      %v1375 = vpack.c.b16 %v883, %v879
      %v1376 = vpack.c.b16 %v888, %v884
      %v1377 = vpack.c.b16 %v889, %v885
      %v1378 = vpack.c.b16 %v890, %v886
      %v1379 = vpack.c.b16 %v891, %v887
      %v1380 = vpack.c.b16 %v896, %v892
      %v1381 = vpack.c.b16 %v897, %v893
      %v1382 = vpack.c.b16 %v898, %v894
      %v1383 = vpack.c.b16 %v899, %v895
      %v1384 = vpack.c.b16 %v904, %v900
      %v1385 = vpack.c.b16 %v905, %v901
      %v1386 = vpack.c.b16 %v906, %v902
      %v1387 = vpack.c.b16 %v907, %v903
      %v1388 = vpack.c.b16 %v912, %v908
      %v1389 = vpack.c.b16 %v913, %v909
      %v1390 = vpack.c.b16 %v914, %v910
      %v1391 = vpack.c.b16 %v915, %v911
      %v1392 = vpack.c.b16 %v920, %v916
      %v1393 = vpack.c.b16 %v921, %v917
      %v1394 = vpack.c.b16 %v922, %v918
      %v1395 = vpack.c.b16 %v923, %v919
      %v1396 = vpack.c.b16 %v928, %v924
      %v1397 = vpack.c.b16 %v929, %v925
      %v1398 = vpack.c.b16 %v930, %v926
      %v1399 = vpack.c.b16 %v931, %v927
      %v1400 = vpack.c.b16 %v936, %v932
      %v1401 = vpack.c.b16 %v937, %v933
      %v1402 = vpack.c.b16 %v938, %v934
      %v1403 = vpack.c.b16 %v939, %v935
      %v1404 = vpack.c.b16 %v944, %v940
      %v1405 = vpack.c.b16 %v945, %v941
      %v1406 = vpack.c.b16 %v946, %v942
      %v1407 = vpack.c.b16 %v947, %v943
      %v1408 = vpack.c.b16 %v952, %v948
      %v1409 = vpack.c.b16 %v953, %v949
      %v1410 = vpack.c.b16 %v954, %v950
      %v1411 = vpack.c.b16 %v955, %v951
      %v1412 = vpack.c.b16 %v960, %v956
      %v1413 = vpack.c.b16 %v961, %v957
      %v1414 = vpack.c.b16 %v962, %v958
      %v1415 = vpack.c.b16 %v963, %v959
      %v1416 = vpack.c.b16 %v968, %v964
      %v1417 = vpack.c.b16 %v969, %v965
      %v1418 = vpack.c.b16 %v970, %v966
      %v1419 = vpack.c.b16 %v971, %v967
      %v1420 = vpack.c.b16 %v976, %v972
      %v1421 = vpack.c.b16 %v977, %v973
      %v1422 = vpack.c.b16 %v978, %v974
      %v1423 = vpack.c.b16 %v979, %v975
      %v1424 = vpack.c.b16 %v984, %v980
      %v1425 = vpack.c.b16 %v985, %v981
      %v1426 = vpack.c.b16 %v986, %v982
      %v1427 = vpack.c.b16 %v987, %v983
      %v1428 = vpack.c.b16 %v992, %v988
      %v1429 = vpack.c.b16 %v993, %v989
      %v1430 = vpack.c.b16 %v994, %v990
      %v1431 = vpack.c.b16 %v995, %v991
      %v1432 = vpack.c.b16 %v1000, %v996
      %v1433 = vpack.c.b16 %v1001, %v997
      %v1434 = vpack.c.b16 %v1002, %v998
      %v1435 = vpack.c.b16 %v1003, %v999
      %v1436 = vpack.c.b16 %v1008, %v1004
      %v1437 = vpack.c.b16 %v1009, %v1005
      %v1438 = vpack.c.b16 %v1010, %v1006
      %v1439 = vpack.c.b16 %v1011, %v1007
      %v1440 = vpack.c.b16 %v1016, %v1012
      %v1441 = vpack.c.b16 %v1017, %v1013
      %v1442 = vpack.c.b16 %v1018, %v1014
      %v1443 = vpack.c.b16 %v1019, %v1015
      %v1444 = vpack.c.b16 %v1024, %v1020
      %v1445 = vpack.c.b16 %v1025, %v1021
      %v1446 = vpack.c.b16 %v1026, %v1022
      %v1447 = vpack.c.b16 %v1027, %v1023
      %v1448 = vpack.c.b16 %v1032, %v1028
      %v1449 = vpack.c.b16 %v1033, %v1029
      %v1450 = vpack.c.b16 %v1034, %v1030
      %v1451 = vpack.c.b16 %v1035, %v1031
      %v1452 = vpack.c.b16 %v1040, %v1036
      %v1453 = vpack.c.b16 %v1041, %v1037
      %v1454 = vpack.c.b16 %v1042, %v1038
      %v1455 = vpack.c.b16 %v1043, %v1039
      %v1456 = vpack.c.b16 %v1048, %v1044
      %v1457 = vpack.c.b16 %v1049, %v1045
      %v1458 = vpack.c.b16 %v1050, %v1046
      %v1459 = vpack.c.b16 %v1051, %v1047
      %v1460 = vpack.c.b16 %v1056, %v1052
      %v1461 = vpack.c.b16 %v1057, %v1053
      %v1462 = vpack.c.b16 %v1058, %v1054
      %v1463 = vpack.c.b16 %v1059, %v1055
      %v1464 = vpack.c.b16 %v1064, %v1060
      %v1465 = vpack.c.b16 %v1065, %v1061
      %v1466 = vpack.c.b16 %v1066, %v1062
      %v1467 = vpack.c.b16 %v1067, %v1063
      %v1468 = vpack.c.b16 %v1072, %v1068
      %v1469 = vpack.c.b16 %v1073, %v1069
      %v1470 = vpack.c.b16 %v1074, %v1070
      %v1471 = vpack.c.b16 %v1075, %v1071
      %v1472 = vpack.c.b16 %v1080, %v1076
      %v1473 = vpack.c.b16 %v1081, %v1077
      %v1474 = vpack.c.b16 %v1082, %v1078
      %v1475 = vpack.c.b16 %v1083, %v1079
      %v1476 = vpack.c.b16 %v1088, %v1084
      %v1477 = vpack.c.b16 %v1089, %v1085
      %v1478 = vpack.c.b16 %v1090, %v1086
      %v1479 = vpack.c.b16 %v1091, %v1087
      %v1480 = vpack.c.b16 %v1096, %v1092
      %v1481 = vpack.c.b16 %v1097, %v1093
      %v1482 = vpack.c.b16 %v1098, %v1094
      %v1483 = vpack.c.b16 %v1099, %v1095
      %v1484 = vpack.c.b16 %v1104, %v1100
      %v1485 = vpack.c.b16 %v1105, %v1101
      %v1486 = vpack.c.b16 %v1106, %v1102
      %v1487 = vpack.c.b16 %v1107, %v1103
      %v1488 = vpack.c.b16 %v1112, %v1108
      %v1489 = vpack.c.b16 %v1113, %v1109
      %v1490 = vpack.c.b16 %v1114, %v1110
      %v1491 = vpack.c.b16 %v1115, %v1111
      %v1492 = vpack.c.b16 %v1120, %v1116
      %v1493 = vpack.c.b16 %v1121, %v1117
      %v1494 = vpack.c.b16 %v1122, %v1118
      %v1495 = vpack.c.b16 %v1123, %v1119
      %v1496 = vpack.c.b16 %v1128, %v1124
      %v1497 = vpack.c.b16 %v1129, %v1125
      %v1498 = vpack.c.b16 %v1130, %v1126
      %v1499 = vpack.c.b16 %v1131, %v1127
      %v1500 = vpack.c.b16 %v1136, %v1132
      %v1501 = vpack.c.b16 %v1137, %v1133
      %v1502 = vpack.c.b16 %v1138, %v1134
      %v1503 = vpack.c.b16 %v1139, %v1135
      %v1504 = vpack.c.b16 %v1144, %v1140
      %v1505 = vpack.c.b16 %v1145, %v1141
      %v1506 = vpack.c.b16 %v1146, %v1142
      %v1507 = vpack.c.b16 %v1147, %v1143
      %v1508 = vpack.c.b16 %v1152, %v1148
      %v1509 = vpack.c.b16 %v1153, %v1149
      %v1510 = vpack.c.b16 %v1154, %v1150
      %v1511 = vpack.c.b16 %v1155, %v1151
      %v1512 = vpack.c.b16 %v1160, %v1156
      %v1513 = vpack.c.b16 %v1161, %v1157
      %v1514 = vpack.c.b16 %v1162, %v1158
      %v1515 = vpack.c.b16 %v1163, %v1159
      %v1516 = vpack.c.b16 %v1168, %v1164
      %v1517 = vpack.c.b16 %v1169, %v1165
      %v1518 = vpack.c.b16 %v1170, %v1166
      %v1519 = vpack.c.b16 %v1171, %v1167
      %v1520 = vpack.c.b16 %v1176, %v1172
      %v1521 = vpack.c.b16 %v1177, %v1173
      %v1522 = vpack.c.b16 %v1178, %v1174
      %v1523 = vpack.c.b16 %v1179, %v1175
      %v1524 = vpack.c.b16 %v1184, %v1180
      %v1525 = vpack.c.b16 %v1185, %v1181
      %v1526 = vpack.c.b16 %v1186, %v1182
      %v1527 = vpack.c.b16 %v1187, %v1183
      %v1528 = vpack.c.b16 %v1192, %v1188
      %v1529 = vpack.c.b16 %v1193, %v1189
      %v1530 = vpack.c.b16 %v1194, %v1190
      %v1531 = vpack.c.b16 %v1195, %v1191
      %v1532 = vpack.c.b16 %v1200, %v1196
      %v1533 = vpack.c.b16 %v1201, %v1197
      %v1534 = vpack.c.b16 %v1202, %v1198
      %v1535 = vpack.c.b16 %v1203, %v1199
      %v1536 = vpack.c.b16 %v1208, %v1204
      %v1537 = vpack.c.b16 %v1209, %v1205
      %v1538 = vpack.c.b16 %v1210, %v1206
      %v1539 = vpack.c.b16 %v1211, %v1207
      %v1540 = vpack.c.b16 %v1216, %v1212
      %v1541 = vpack.c.b16 %v1217, %v1213
      %v1542 = vpack.c.b16 %v1218, %v1214
      %v1543 = vpack.c.b16 %v1219, %v1215
      %v1544 = vpack.c.b16 %v1224, %v1220
      %v1545 = vpack.c.b16 %v1225, %v1221
      %v1546 = vpack.c.b16 %v1226, %v1222
      %v1547 = vpack.c.b16 %v1227, %v1223
      %v1548 = vpack.c.b16 %v1232, %v1228
      %v1549 = vpack.c.b16 %v1233, %v1229
      %v1550 = vpack.c.b16 %v1234, %v1230
      %v1551 = vpack.c.b16 %v1235, %v1231
      %v1552 = vpack.c.b16 %v1240, %v1236
      %v1553 = vpack.c.b16 %v1241, %v1237
      %v1554 = vpack.c.b16 %v1242, %v1238
      %v1555 = vpack.c.b16 %v1243, %v1239
      %v1556 = vpack.c.b16 %v1248, %v1244
      %v1557 = vpack.c.b16 %v1249, %v1245
      %v1558 = vpack.c.b16 %v1250, %v1246
      %v1559 = vpack.c.b16 %v1251, %v1247
      %v1560 = vpack.c.b16 %v1256, %v1252
      %v1561 = vpack.c.b16 %v1257, %v1253
      %v1562 = vpack.c.b16 %v1258, %v1254
      %v1563 = vpack.c.b16 %v1259, %v1255
      %v1564 = vpack.c.b16 %v1264, %v1260
      %v1565 = vpack.c.b16 %v1265, %v1261
      %v1566 = vpack.c.b16 %v1266, %v1262
      %v1567 = vpack.c.b16 %v1267, %v1263
      %v1568 = vpack.c.b16 %v1272, %v1268
      %v1569 = vpack.c.b16 %v1273, %v1269
      %v1570 = vpack.c.b16 %v1274, %v1270
      %v1571 = vpack.c.b16 %v1275, %v1271
      %v1572 = vpack.c.b16 %v1280, %v1276
      %v1573 = vpack.c.b16 %v1281, %v1277
      %v1574 = vpack.c.b16 %v1282, %v1278
      %v1575 = vpack.c.b16 %v1283, %v1279
      %v1576 = vpack.c.b16 %v1288, %v1284
      %v1577 = vpack.c.b16 %v1289, %v1285
      %v1578 = vpack.c.b16 %v1290, %v1286
      %v1579 = vpack.c.b16 %v1291, %v1287
      %v1580 = vpack.c.b16 %v1296, %v1292
      %v1581 = vpack.c.b16 %v1297, %v1293
      %v1582 = vpack.c.b16 %v1298, %v1294
      %v1583 = vpack.c.b16 %v1299, %v1295
      %v1584 = vpack.c.b16 %v1304, %v1300
      %v1585 = vpack.c.b16 %v1305, %v1301
      %v1586 = vpack.c.b16 %v1306, %v1302
      %v1587 = vpack.c.b16 %v1307, %v1303
      %v1588 = vpack.c.b16 %v1312, %v1308
      %v1589 = vpack.c.b16 %v1313, %v1309
      %v1590 = vpack.c.b16 %v1314, %v1310
      %v1591 = vpack.c.b16 %v1315, %v1311
      %v1592 = vpack.c.b16 %v1320, %v1316
      %v1593 = vpack.c.b16 %v1321, %v1317
      %v1594 = vpack.c.b16 %v1322, %v1318
      %v1595 = vpack.c.b16 %v1323, %v1319
      %v1596 = vpack.c.b16 %v1328, %v1324
      %v1597 = vpack.c.b16 %v1329, %v1325
      %v1598 = vpack.c.b16 %v1330, %v1326
      %v1599 = vpack.c.b16 %v1331, %v1327
      %v1600 = vpack.c.b16 %v1336, %v1332
      %v1601 = vpack.c.b16 %v1337, %v1333
      %v1602 = vpack.c.b16 %v1338, %v1334
      %v1603 = vpack.c.b16 %v1339, %v1335
      %v1604 = vpack.c.b16 %v1344, %v1340
      %v1605 = vpack.c.b16 %v1345, %v1341
      %v1606 = vpack.c.b16 %v1346, %v1342
      %v1607 = vpack.c.b16 %v1347, %v1343
      %v1608 = vpack.c.b16 %v1352, %v1348
      %v1609 = vpack.c.b16 %v1353, %v1349
      %v1610 = vpack.c.b16 %v1354, %v1350
      %v1611 = vpack.c.b16 %v1355, %v1351
      %1868 = vmatprep.subr.bf16.mxu0 %v1385
      %1869 = vmatpush1.bf16.msra.mxu0 %v1384
      %1870 = vmatprep.subr.bf16.mxu0 %v1381
      %1871 = vmatpush1.bf16.msra.mxu0 %v1380
      %1872 = vmatprep.subr.bf16.mxu0 %v1377
      %1873 = vmatpush1.bf16.msra.mxu0 %v1376
      %1874 = vmatprep.subr.bf16.mxu0 %v1373
      %1875 = vmatpush1.bf16.msra.mxu0 %v1372
      %1876 = vmatprep.subr.bf16.mxu0 %v1369
      %1877 = vmatpush1.bf16.msra.mxu0 %v1368
      %1878 = vmatprep.subr.bf16.mxu0 %v1365
      %1879 = vmatpush1.bf16.msra.mxu0 %v1364
      %1880 = vmatprep.subr.bf16.mxu0 %v1361
      %1881 = vmatpush1.bf16.msra.mxu0 %v1360
      %1882 = vmatprep.subr.bf16.mxu0 %v1357
      %1883 = vmatpush1.bf16.msra.mxu0 %v1356
      %1884 = vmatprep.subr.bf16.mxu0 %v1417
      %1885 = vmatpush2.bf16.msra.mxu0 %v1416
      %1886 = vmatprep.subr.bf16.mxu0 %v1413
      %1887 = vmatpush2.bf16.msra.mxu0 %v1412
      %1888 = vmatprep.subr.bf16.mxu0 %v1409
      %1889 = vmatpush2.bf16.msra.mxu0 %v1408
      %1890 = vmatprep.subr.bf16.mxu0 %v1405
      %1891 = vmatpush2.bf16.msra.mxu0 %v1404
      %1892 = vmatprep.subr.bf16.mxu0 %v1401
      %1893 = vmatpush2.bf16.msra.mxu0 %v1400
      %1894 = vmatprep.subr.bf16.mxu0 %v1397
      %1895 = vmatpush2.bf16.msra.mxu0 %v1396
      %1896 = vmatprep.subr.bf16.mxu0 %v1393
      %1897 = vmatpush2.bf16.msra.mxu0 %v1392
      %1898 = vmatprep.subr.bf16.mxu0 %v1389
      %1899 = vmatpush2.bf16.msra.mxu0 %v1388
      %1900 = vmatprep.mubr.bf16.mxu0 %v303
      %1901 = vmatmul.mubr.bf16.gmra.mxu0 %v302
      %v1902 = vpop.f32.mrf.mxu0
      %v1903 = vadd.f32 %v571, %v1902
      %v1904 = vpop.f32.mrf.mxu0
      %v1905 = vadd.f32 %v575, %v1904
      %v1906 = vpop.f32.mrf.mxu0
      %v1907 = vadd.f32 %v571, %v1906
      %v1908 = vpop.f32.mrf.mxu0
      %v1909 = vadd.f32 %v575, %v1908
      %1910 = vdwg.mxu0
      %1911 = vmatprep.subr.bf16.mxu0 %v1449
      %1912 = vmatpush1.bf16.msra.mxu0 %v1448
      %1913 = vmatprep.subr.bf16.mxu0 %v1445
      %1914 = vmatpush1.bf16.msra.mxu0 %v1444
      %1915 = vmatprep.subr.bf16.mxu0 %v1441
      %1916 = vmatpush1.bf16.msra.mxu0 %v1440
      %1917 = vmatprep.subr.bf16.mxu0 %v1437
      %1918 = vmatpush1.bf16.msra.mxu0 %v1436
      %1919 = vmatprep.subr.bf16.mxu0 %v1433
      %1920 = vmatpush1.bf16.msra.mxu0 %v1432
      %1921 = vmatprep.subr.bf16.mxu0 %v1429
      %1922 = vmatpush1.bf16.msra.mxu0 %v1428
      %1923 = vmatprep.subr.bf16.mxu0 %v1425
      %1924 = vmatpush1.bf16.msra.mxu0 %v1424
      %1925 = vmatprep.subr.bf16.mxu0 %v1421
      %1926 = vmatpush1.bf16.msra.mxu0 %v1420
      %1927 = vmatprep.subr.bf16.mxu0 %v1481
      %1928 = vmatpush2.bf16.msra.mxu0 %v1480
      %1929 = vmatprep.subr.bf16.mxu0 %v1477
      %1930 = vmatpush2.bf16.msra.mxu0 %v1476
      %1931 = vmatprep.subr.bf16.mxu0 %v1473
      %1932 = vmatpush2.bf16.msra.mxu0 %v1472
      %1933 = vmatprep.subr.bf16.mxu0 %v1469
      %1934 = vmatpush2.bf16.msra.mxu0 %v1468
      %1935 = vmatprep.subr.bf16.mxu0 %v1465
      %1936 = vmatpush2.bf16.msra.mxu0 %v1464
      %1937 = vmatprep.subr.bf16.mxu0 %v1461
      %1938 = vmatpush2.bf16.msra.mxu0 %v1460
      %1939 = vmatprep.subr.bf16.mxu0 %v1457
      %1940 = vmatpush2.bf16.msra.mxu0 %v1456
      %1941 = vmatprep.subr.bf16.mxu0 %v1453
      %1942 = vmatpush2.bf16.msra.mxu0 %v1452
      %1943 = vmatprep.mubr.bf16.mxu0 %v305
      %1944 = vmatmul.mubr.bf16.gmra.mxu0 %v304
      %v1945 = vpop.f32.mrf.mxu0
      %v1946 = vadd.f32 %v1903, %v1945
      %v1947 = vpop.f32.mrf.mxu0
      %v1948 = vadd.f32 %v1905, %v1947
      %v1949 = vpop.f32.mrf.mxu0
      %v1950 = vadd.f32 %v1907, %v1949
      %v1951 = vpop.f32.mrf.mxu0
      %v1952 = vadd.f32 %v1909, %v1951
      %1953 = vdwg.mxu0
      %1954 = vmatprep.subr.bf16.mxu0 %v1513
      %1955 = vmatpush1.bf16.msra.mxu0 %v1512
      %1956 = vmatprep.subr.bf16.mxu0 %v1509
      %1957 = vmatpush1.bf16.msra.mxu0 %v1508
      %1958 = vmatprep.subr.bf16.mxu0 %v1505
      %1959 = vmatpush1.bf16.msra.mxu0 %v1504
      %1960 = vmatprep.subr.bf16.mxu0 %v1501
      %1961 = vmatpush1.bf16.msra.mxu0 %v1500
      %1962 = vmatprep.subr.bf16.mxu0 %v1497
      %1963 = vmatpush1.bf16.msra.mxu0 %v1496
      %1964 = vmatprep.subr.bf16.mxu0 %v1493
      %1965 = vmatpush1.bf16.msra.mxu0 %v1492
      %1966 = vmatprep.subr.bf16.mxu0 %v1489
      %1967 = vmatpush1.bf16.msra.mxu0 %v1488
      %1968 = vmatprep.subr.bf16.mxu0 %v1485
      %1969 = vmatpush1.bf16.msra.mxu0 %v1484
      %1970 = vmatprep.subr.bf16.mxu0 %v1545
      %1971 = vmatpush2.bf16.msra.mxu0 %v1544
      %1972 = vmatprep.subr.bf16.mxu0 %v1541
      %1973 = vmatpush2.bf16.msra.mxu0 %v1540
      %1974 = vmatprep.subr.bf16.mxu0 %v1537
      %1975 = vmatpush2.bf16.msra.mxu0 %v1536
      %1976 = vmatprep.subr.bf16.mxu0 %v1533
      %1977 = vmatpush2.bf16.msra.mxu0 %v1532
      %1978 = vmatprep.subr.bf16.mxu0 %v1529
      %1979 = vmatpush2.bf16.msra.mxu0 %v1528
      %1980 = vmatprep.subr.bf16.mxu0 %v1525
      %1981 = vmatpush2.bf16.msra.mxu0 %v1524
      %1982 = vmatprep.subr.bf16.mxu0 %v1521
      %1983 = vmatpush2.bf16.msra.mxu0 %v1520
      %1984 = vmatprep.subr.bf16.mxu0 %v1517
      %1985 = vmatpush2.bf16.msra.mxu0 %v1516
      %1986 = vmatprep.mubr.bf16.mxu0 %v307
      %1987 = vmatmul.mubr.bf16.gmra.mxu0 %v306
      %v1988 = vpop.f32.mrf.mxu0
      %v1989 = vadd.f32 %v1946, %v1988
      %v1990 = vpop.f32.mrf.mxu0
      %v1991 = vadd.f32 %v1948, %v1990
      %v1992 = vpop.f32.mrf.mxu0
      %v1993 = vadd.f32 %v1950, %v1992
      %v1994 = vpop.f32.mrf.mxu0
      %v1995 = vadd.f32 %v1952, %v1994
      %1996 = vdwg.mxu0
      %1997 = vmatprep.subr.bf16.mxu0 %v1577
      %1998 = vmatpush1.bf16.msra.mxu0 %v1576
      %1999 = vmatprep.subr.bf16.mxu0 %v1573
      %2000 = vmatpush1.bf16.msra.mxu0 %v1572
      %2001 = vmatprep.subr.bf16.mxu0 %v1569
      %2002 = vmatpush1.bf16.msra.mxu0 %v1568
      %2003 = vmatprep.subr.bf16.mxu0 %v1565
      %2004 = vmatpush1.bf16.msra.mxu0 %v1564
      %2005 = vmatprep.subr.bf16.mxu0 %v1561
      %2006 = vmatpush1.bf16.msra.mxu0 %v1560
      %2007 = vmatprep.subr.bf16.mxu0 %v1557
      %2008 = vmatpush1.bf16.msra.mxu0 %v1556
      %2009 = vmatprep.subr.bf16.mxu0 %v1553
      %2010 = vmatpush1.bf16.msra.mxu0 %v1552
      %2011 = vmatprep.subr.bf16.mxu0 %v1549
      %2012 = vmatpush1.bf16.msra.mxu0 %v1548
      %2013 = vmatprep.subr.bf16.mxu0 %v1609
      %2014 = vmatpush2.bf16.msra.mxu0 %v1608
      %2015 = vmatprep.subr.bf16.mxu0 %v1605
      %2016 = vmatpush2.bf16.msra.mxu0 %v1604
      %2017 = vmatprep.subr.bf16.mxu0 %v1601
      %2018 = vmatpush2.bf16.msra.mxu0 %v1600
      %2019 = vmatprep.subr.bf16.mxu0 %v1597
      %2020 = vmatpush2.bf16.msra.mxu0 %v1596
      %2021 = vmatprep.subr.bf16.mxu0 %v1593
      %2022 = vmatpush2.bf16.msra.mxu0 %v1592
      %2023 = vmatprep.subr.bf16.mxu0 %v1589
      %2024 = vmatpush2.bf16.msra.mxu0 %v1588
      %2025 = vmatprep.subr.bf16.mxu0 %v1585
      %2026 = vmatpush2.bf16.msra.mxu0 %v1584
      %2027 = vmatprep.subr.bf16.mxu0 %v1581
      %2028 = vmatpush2.bf16.msra.mxu0 %v1580
      %2029 = vmatprep.mubr.bf16.mxu0 %v309
      %2030 = vmatmul.mubr.bf16.gmra.mxu0 %v308
      %v2031 = vpop.f32.mrf.mxu0
      %v2032 = vadd.f32 %v1989, %v2031
      %v2033 = vpop.f32.mrf.mxu0
      %v2034 = vadd.f32 %v1991, %v2033
      %v2035 = vpop.f32.mrf.mxu0
      %v2036 = vadd.f32 %v1993, %v2035
      %v2037 = vpop.f32.mrf.mxu0
      %v2038 = vadd.f32 %v1995, %v2037
      %2039 = vdwg.mxu0
      %2040 = vmatprep.subr.bf16.mxu0 %v1387
      %2041 = vmatpush1.bf16.msra.mxu0 %v1386
      %2042 = vmatprep.subr.bf16.mxu0 %v1383
      %2043 = vmatpush1.bf16.msra.mxu0 %v1382
      %2044 = vmatprep.subr.bf16.mxu0 %v1379
      %2045 = vmatpush1.bf16.msra.mxu0 %v1378
      %2046 = vmatprep.subr.bf16.mxu0 %v1375
      %2047 = vmatpush1.bf16.msra.mxu0 %v1374
      %2048 = vmatprep.subr.bf16.mxu0 %v1371
      %2049 = vmatpush1.bf16.msra.mxu0 %v1370
      %2050 = vmatprep.subr.bf16.mxu0 %v1367
      %2051 = vmatpush1.bf16.msra.mxu0 %v1366
      %2052 = vmatprep.subr.bf16.mxu0 %v1363
      %2053 = vmatpush1.bf16.msra.mxu0 %v1362
      %2054 = vmatprep.subr.bf16.mxu0 %v1359
      %2055 = vmatpush1.bf16.msra.mxu0 %v1358
      %2056 = vmatprep.subr.bf16.mxu0 %v1419
      %2057 = vmatpush2.bf16.msra.mxu0 %v1418
      %2058 = vmatprep.subr.bf16.mxu0 %v1415
      %2059 = vmatpush2.bf16.msra.mxu0 %v1414
      %2060 = vmatprep.subr.bf16.mxu0 %v1411
      %2061 = vmatpush2.bf16.msra.mxu0 %v1410
      %2062 = vmatprep.subr.bf16.mxu0 %v1407
      %2063 = vmatpush2.bf16.msra.mxu0 %v1406
      %2064 = vmatprep.subr.bf16.mxu0 %v1403
      %2065 = vmatpush2.bf16.msra.mxu0 %v1402
      %2066 = vmatprep.subr.bf16.mxu0 %v1399
      %2067 = vmatpush2.bf16.msra.mxu0 %v1398
      %2068 = vmatprep.subr.bf16.mxu0 %v1395
      %2069 = vmatpush2.bf16.msra.mxu0 %v1394
      %2070 = vmatprep.subr.bf16.mxu0 %v1391
      %2071 = vmatpush2.bf16.msra.mxu0 %v1390
      %2072 = vmatprep.mubr.bf16.mxu0 %v303
      %2073 = vmatmul.mubr.bf16.gmra.mxu0 %v302
      %v2074 = vpop.f32.mrf.mxu0
      %v2075 = vadd.f32 %v579, %v2074
      %v2076 = vpop.f32.mrf.mxu0
      %v2077 = vadd.f32 %v583, %v2076
      %v2078 = vpop.f32.mrf.mxu0
      %v2079 = vadd.f32 %v579, %v2078
      %v2080 = vpop.f32.mrf.mxu0
      %v2081 = vadd.f32 %v583, %v2080
      %2082 = vdwg.mxu0
      %2083 = vmatprep.subr.bf16.mxu0 %v1451
      %2084 = vmatpush1.bf16.msra.mxu0 %v1450
      %2085 = vmatprep.subr.bf16.mxu0 %v1447
      %2086 = vmatpush1.bf16.msra.mxu0 %v1446
      %2087 = vmatprep.subr.bf16.mxu0 %v1443
      %2088 = vmatpush1.bf16.msra.mxu0 %v1442
      %2089 = vmatprep.subr.bf16.mxu0 %v1439
      %2090 = vmatpush1.bf16.msra.mxu0 %v1438
      %2091 = vmatprep.subr.bf16.mxu0 %v1435
      %2092 = vmatpush1.bf16.msra.mxu0 %v1434
      %2093 = vmatprep.subr.bf16.mxu0 %v1431
      %2094 = vmatpush1.bf16.msra.mxu0 %v1430
      %2095 = vmatprep.subr.bf16.mxu0 %v1427
      %2096 = vmatpush1.bf16.msra.mxu0 %v1426
      %2097 = vmatprep.subr.bf16.mxu0 %v1423
      %2098 = vmatpush1.bf16.msra.mxu0 %v1422
      %2099 = vmatprep.subr.bf16.mxu0 %v1483
      %2100 = vmatpush2.bf16.msra.mxu0 %v1482
      %2101 = vmatprep.subr.bf16.mxu0 %v1479
      %2102 = vmatpush2.bf16.msra.mxu0 %v1478
      %2103 = vmatprep.subr.bf16.mxu0 %v1475
      %2104 = vmatpush2.bf16.msra.mxu0 %v1474
      %2105 = vmatprep.subr.bf16.mxu0 %v1471
      %2106 = vmatpush2.bf16.msra.mxu0 %v1470
      %2107 = vmatprep.subr.bf16.mxu0 %v1467
      %2108 = vmatpush2.bf16.msra.mxu0 %v1466
      %2109 = vmatprep.subr.bf16.mxu0 %v1463
      %2110 = vmatpush2.bf16.msra.mxu0 %v1462
      %2111 = vmatprep.subr.bf16.mxu0 %v1459
      %2112 = vmatpush2.bf16.msra.mxu0 %v1458
      %2113 = vmatprep.subr.bf16.mxu0 %v1455
      %2114 = vmatpush2.bf16.msra.mxu0 %v1454
      %2115 = vmatprep.mubr.bf16.mxu0 %v305
      %2116 = vmatmul.mubr.bf16.gmra.mxu0 %v304
      %v2117 = vpop.f32.mrf.mxu0
      %v2118 = vadd.f32 %v2075, %v2117
      %v2119 = vpop.f32.mrf.mxu0
      %v2120 = vadd.f32 %v2077, %v2119
      %v2121 = vpop.f32.mrf.mxu0
      %v2122 = vadd.f32 %v2079, %v2121
      %v2123 = vpop.f32.mrf.mxu0
      %v2124 = vadd.f32 %v2081, %v2123
      %2125 = vdwg.mxu0
      %2126 = vmatprep.subr.bf16.mxu0 %v1515
      %2127 = vmatpush1.bf16.msra.mxu0 %v1514
      %2128 = vmatprep.subr.bf16.mxu0 %v1511
      %2129 = vmatpush1.bf16.msra.mxu0 %v1510
      %2130 = vmatprep.subr.bf16.mxu0 %v1507
      %2131 = vmatpush1.bf16.msra.mxu0 %v1506
      %2132 = vmatprep.subr.bf16.mxu0 %v1503
      %2133 = vmatpush1.bf16.msra.mxu0 %v1502
      %2134 = vmatprep.subr.bf16.mxu0 %v1499
      %2135 = vmatpush1.bf16.msra.mxu0 %v1498
      %2136 = vmatprep.subr.bf16.mxu0 %v1495
      %2137 = vmatpush1.bf16.msra.mxu0 %v1494
      %2138 = vmatprep.subr.bf16.mxu0 %v1491
      %2139 = vmatpush1.bf16.msra.mxu0 %v1490
      %2140 = vmatprep.subr.bf16.mxu0 %v1487
      %2141 = vmatpush1.bf16.msra.mxu0 %v1486
      %2142 = vmatprep.subr.bf16.mxu0 %v1547
      %2143 = vmatpush2.bf16.msra.mxu0 %v1546
      %2144 = vmatprep.subr.bf16.mxu0 %v1543
      %2145 = vmatpush2.bf16.msra.mxu0 %v1542
      %2146 = vmatprep.subr.bf16.mxu0 %v1539
      %2147 = vmatpush2.bf16.msra.mxu0 %v1538
      %2148 = vmatprep.subr.bf16.mxu0 %v1535
      %2149 = vmatpush2.bf16.msra.mxu0 %v1534
      %2150 = vmatprep.subr.bf16.mxu0 %v1531
      %2151 = vmatpush2.bf16.msra.mxu0 %v1530
      %2152 = vmatprep.subr.bf16.mxu0 %v1527
      %2153 = vmatpush2.bf16.msra.mxu0 %v1526
      %2154 = vmatprep.subr.bf16.mxu0 %v1523
      %2155 = vmatpush2.bf16.msra.mxu0 %v1522
      %2156 = vmatprep.subr.bf16.mxu0 %v1519
      %2157 = vmatpush2.bf16.msra.mxu0 %v1518
      %2158 = vmatprep.mubr.bf16.mxu0 %v307
      %2159 = vmatmul.mubr.bf16.gmra.mxu0 %v306
      %v2160 = vpop.f32.mrf.mxu0
      %v2161 = vadd.f32 %v2118, %v2160
      %v2162 = vpop.f32.mrf.mxu0
      %v2163 = vadd.f32 %v2120, %v2162
      %v2164 = vpop.f32.mrf.mxu0
      %v2165 = vadd.f32 %v2122, %v2164
      %v2166 = vpop.f32.mrf.mxu0
      %v2167 = vadd.f32 %v2124, %v2166
      %2168 = vdwg.mxu0
      %2169 = vmatprep.subr.bf16.mxu0 %v1579
      %2170 = vmatpush1.bf16.msra.mxu0 %v1578
      %2171 = vmatprep.subr.bf16.mxu0 %v1575
      %2172 = vmatpush1.bf16.msra.mxu0 %v1574
      %2173 = vmatprep.subr.bf16.mxu0 %v1571
      %2174 = vmatpush1.bf16.msra.mxu0 %v1570
      %2175 = vmatprep.subr.bf16.mxu0 %v1567
      %2176 = vmatpush1.bf16.msra.mxu0 %v1566
      %2177 = vmatprep.subr.bf16.mxu0 %v1563
      %2178 = vmatpush1.bf16.msra.mxu0 %v1562
      %2179 = vmatprep.subr.bf16.mxu0 %v1559
      %2180 = vmatpush1.bf16.msra.mxu0 %v1558
      %2181 = vmatprep.subr.bf16.mxu0 %v1555
      %2182 = vmatpush1.bf16.msra.mxu0 %v1554
      %2183 = vmatprep.subr.bf16.mxu0 %v1551
      %2184 = vmatpush1.bf16.msra.mxu0 %v1550
      %2185 = vmatprep.subr.bf16.mxu0 %v1611
      %2186 = vmatpush2.bf16.msra.mxu0 %v1610
      %2187 = vmatprep.subr.bf16.mxu0 %v1607
      %2188 = vmatpush2.bf16.msra.mxu0 %v1606
      %2189 = vmatprep.subr.bf16.mxu0 %v1603
      %2190 = vmatpush2.bf16.msra.mxu0 %v1602
      %2191 = vmatprep.subr.bf16.mxu0 %v1599
      %2192 = vmatpush2.bf16.msra.mxu0 %v1598
      %2193 = vmatprep.subr.bf16.mxu0 %v1595
      %2194 = vmatpush2.bf16.msra.mxu0 %v1594
      %2195 = vmatprep.subr.bf16.mxu0 %v1591
      %2196 = vmatpush2.bf16.msra.mxu0 %v1590
      %2197 = vmatprep.subr.bf16.mxu0 %v1587
      %2198 = vmatpush2.bf16.msra.mxu0 %v1586
      %2199 = vmatprep.subr.bf16.mxu0 %v1583
      %2200 = vmatpush2.bf16.msra.mxu0 %v1582
      %2201 = vmatprep.mubr.bf16.mxu0 %v309
      %2202 = vmatmul.mubr.bf16.gmra.mxu0 %v308
      %v2203 = vpop.f32.mrf.mxu0
      %v2204 = vadd.f32 %v2161, %v2203
      %v2205 = vpop.f32.mrf.mxu0
      %v2206 = vadd.f32 %v2163, %v2205
      %v2207 = vpop.f32.mrf.mxu0
      %v2208 = vadd.f32 %v2165, %v2207
      %v2209 = vpop.f32.mrf.mxu0
      %v2210 = vadd.f32 %v2167, %v2209
      %2211 = vdwg.mxu0
      %v2212 = vmax.f32 %v2032, 0.0
      %v2213 = vmax.f32 %v2034, 0.0
      %v2214 = vmax.f32 %v2204, 0.0
      %v2215 = vmax.f32 %v2206, 0.0
      %v2216 = vmax.f32 %v2036, 0.0
      %v2217 = vmax.f32 %v2038, 0.0
      %v2218 = vmax.f32 %v2208, 0.0
      %v2219 = vmax.f32 %v2210, 0.0
      %v2220 = vpack.c.bf16 %v2216, %v2212
      %v2221 = vpack.c.bf16 %v2217, %v2213
      %v2222 = vpack.c.bf16 %v2218, %v2214
      %v2223 = vpack.c.bf16 %v2219, %v2215
      %v2224 = vld [vmem:[%s3] sm:$0xff]
      %v2225 = vld [vmem:[%s3 + $0x8] sm:$0xff]
      %v2226 = vld [vmem:[%s3 + $0x10] sm:$0xff]
      %v2227 = vld [vmem:[%s3 + $0x18] sm:$0xff]
      %v2228 = vld [vmem:[%s3 + $0x20] sm:$0xff]
      %v2229 = vld [vmem:[%s3 + $0x28] sm:$0xff]
      %v2230 = vld [vmem:[%s3 + $0x30] sm:$0xff]
      %v2231 = vld [vmem:[%s3 + $0x38] sm:$0xff]
      %v2232 = vld [vmem:[%s3 + $0x40] sm:$0xff]
      %v2233 = vld [vmem:[%s3 + $0x48] sm:$0xff]
      %v2234 = vld [vmem:[%s3 + $0x50] sm:$0xff]
      %v2235 = vld [vmem:[%s3 + $0x58] sm:$0xff]
      %v2236 = vld [vmem:[%s3 + $0x60] sm:$0xff]
      %v2237 = vld [vmem:[%s3 + $0x68] sm:$0xff]
      %v2238 = vld [vmem:[%s3 + $0x70] sm:$0xff]
      %v2239 = vld [vmem:[%s3 + $0x78] sm:$0xff]
      %v2240 = vld [vmem:[%s3 + $0x80] sm:$0xff]
      %v2241 = vld [vmem:[%s3 + $0x88] sm:$0xff]
      %v2242 = vld [vmem:[%s3 + $0x90] sm:$0xff]
      %v2243 = vld [vmem:[%s3 + $0x98] sm:$0xff]
      %v2244 = vld [vmem:[%s3 + $0xa0] sm:$0xff]
      %v2245 = vld [vmem:[%s3 + $0xa8] sm:$0xff]
      %v2246 = vld [vmem:[%s3 + $0xb0] sm:$0xff]
      %v2247 = vld [vmem:[%s3 + $0xb8] sm:$0xff]
      %v2248 = vld [vmem:[%s3 + $0xc0] sm:$0xff]
      %v2249 = vld [vmem:[%s3 + $0xc8] sm:$0xff]
      %v2250 = vld [vmem:[%s3 + $0xd0] sm:$0xff]
      %v2251 = vld [vmem:[%s3 + $0xd8] sm:$0xff]
      %v2252 = vld [vmem:[%s3 + $0xe0] sm:$0xff]
      %v2253 = vld [vmem:[%s3 + $0xe8] sm:$0xff]
      %v2254 = vld [vmem:[%s3 + $0xf0] sm:$0xff]
      %v2255 = vld [vmem:[%s3 + $0xf8] sm:$0xff]
      %v2256 = vld [vmem:[%s3 + $0x100] sm:$0xff]
      %v2257 = vld [vmem:[%s3 + $0x108] sm:$0xff]
      %v2258 = vld [vmem:[%s3 + $0x110] sm:$0xff]
      %v2259 = vld [vmem:[%s3 + $0x118] sm:$0xff]
      %v2260 = vld [vmem:[%s3 + $0x120] sm:$0xff]
      %v2261 = vld [vmem:[%s3 + $0x128] sm:$0xff]
      %v2262 = vld [vmem:[%s3 + $0x130] sm:$0xff]
      %v2263 = vld [vmem:[%s3 + $0x138] sm:$0xff]
      %v2264 = vld [vmem:[%s3 + $0x140] sm:$0xff]
      %v2265 = vld [vmem:[%s3 + $0x148] sm:$0xff]
      %v2266 = vld [vmem:[%s3 + $0x150] sm:$0xff]
      %v2267 = vld [vmem:[%s3 + $0x158] sm:$0xff]
      %v2268 = vld [vmem:[%s3 + $0x160] sm:$0xff]
      %v2269 = vld [vmem:[%s3 + $0x168] sm:$0xff]
      %v2270 = vld [vmem:[%s3 + $0x170] sm:$0xff]
      %v2271 = vld [vmem:[%s3 + $0x178] sm:$0xff]
      %v2272 = vld [vmem:[%s3 + $0x180] sm:$0xff]
      %v2273 = vld [vmem:[%s3 + $0x188] sm:$0xff]
      %v2274 = vld [vmem:[%s3 + $0x190] sm:$0xff]
      %v2275 = vld [vmem:[%s3 + $0x198] sm:$0xff]
      %v2276 = vld [vmem:[%s3 + $0x1a0] sm:$0xff]
      %v2277 = vld [vmem:[%s3 + $0x1a8] sm:$0xff]
      %v2278 = vld [vmem:[%s3 + $0x1b0] sm:$0xff]
      %v2279 = vld [vmem:[%s3 + $0x1b8] sm:$0xff]
      %v2280 = vld [vmem:[%s3 + $0x1c0] sm:$0xff]
      %v2281 = vld [vmem:[%s3 + $0x1c8] sm:$0xff]
      %v2282 = vld [vmem:[%s3 + $0x1d0] sm:$0xff]
      %v2283 = vld [vmem:[%s3 + $0x1d8] sm:$0xff]
      %v2284 = vld [vmem:[%s3 + $0x1e0] sm:$0xff]
      %v2285 = vld [vmem:[%s3 + $0x1e8] sm:$0xff]
      %v2286 = vld [vmem:[%s3 + $0x1f0] sm:$0xff]
      %v2287 = vld [vmem:[%s3 + $0x1f8] sm:$0xff]
      %v2288 = vld [vmem:[%s4] sm:$0x3]
      %v2290 = vlaneseq
      %v2291 = vshrl.u32 %v2290, 7
      %v2292 = vsub.s32 0, %v2291
      %v2293 = vrot.slane %v2288, %v2292
      %v2294 = vlaneseq
      %v2295 = vshrl.u32 %v2294, 7
      %v2296 = vsub.s32 1, %v2295
      %v2297 = vrot.slane %v2288, %v2296
      %v2364 = vunpack.c.l.b16 %v2224
      %v2365 = vunpack.c.h.b16 %v2224
      %v2366 = vunpack.c.l.b16 %v2225
      %v2367 = vunpack.c.h.b16 %v2225
      %v2368 = vunpack.c.l.b16 %v2226
      %v2369 = vunpack.c.h.b16 %v2226
      %v2370 = vunpack.c.l.b16 %v2227
      %v2371 = vunpack.c.h.b16 %v2227
      %v2372 = vunpack.c.l.b16 %v2228
      %v2373 = vunpack.c.h.b16 %v2228
      %v2374 = vunpack.c.l.b16 %v2229
      %v2375 = vunpack.c.h.b16 %v2229
      %v2376 = vunpack.c.l.b16 %v2230
      %v2377 = vunpack.c.h.b16 %v2230
      %v2378 = vunpack.c.l.b16 %v2231
      %v2379 = vunpack.c.h.b16 %v2231
      %v2380 = vunpack.c.l.b16 %v2232
      %v2381 = vunpack.c.h.b16 %v2232
      %v2382 = vunpack.c.l.b16 %v2233
      %v2383 = vunpack.c.h.b16 %v2233
      %v2384 = vunpack.c.l.b16 %v2234
      %v2385 = vunpack.c.h.b16 %v2234
      %v2386 = vunpack.c.l.b16 %v2235
      %v2387 = vunpack.c.h.b16 %v2235
      %v2388 = vunpack.c.l.b16 %v2236
      %v2389 = vunpack.c.h.b16 %v2236
      %v2390 = vunpack.c.l.b16 %v2237
      %v2391 = vunpack.c.h.b16 %v2237
      %v2392 = vunpack.c.l.b16 %v2238
      %v2393 = vunpack.c.h.b16 %v2238
      %v2394 = vunpack.c.l.b16 %v2239
      %v2395 = vunpack.c.h.b16 %v2239
      %v2396 = vunpack.c.l.b16 %v2240
      %v2397 = vunpack.c.h.b16 %v2240
      %v2398 = vunpack.c.l.b16 %v2241
      %v2399 = vunpack.c.h.b16 %v2241
      %v2400 = vunpack.c.l.b16 %v2242
      %v2401 = vunpack.c.h.b16 %v2242
      %v2402 = vunpack.c.l.b16 %v2243
      %v2403 = vunpack.c.h.b16 %v2243
      %v2404 = vunpack.c.l.b16 %v2244
      %v2405 = vunpack.c.h.b16 %v2244
      %v2406 = vunpack.c.l.b16 %v2245
      %v2407 = vunpack.c.h.b16 %v2245
      %v2408 = vunpack.c.l.b16 %v2246
      %v2409 = vunpack.c.h.b16 %v2246
      %v2410 = vunpack.c.l.b16 %v2247
      %v2411 = vunpack.c.h.b16 %v2247
      %v2412 = vunpack.c.l.b16 %v2248
      %v2413 = vunpack.c.h.b16 %v2248
      %v2414 = vunpack.c.l.b16 %v2249
      %v2415 = vunpack.c.h.b16 %v2249
      %v2416 = vunpack.c.l.b16 %v2250
      %v2417 = vunpack.c.h.b16 %v2250
      %v2418 = vunpack.c.l.b16 %v2251
      %v2419 = vunpack.c.h.b16 %v2251
      %v2420 = vunpack.c.l.b16 %v2252
      %v2421 = vunpack.c.h.b16 %v2252
      %v2422 = vunpack.c.l.b16 %v2253
      %v2423 = vunpack.c.h.b16 %v2253
      %v2424 = vunpack.c.l.b16 %v2254
      %v2425 = vunpack.c.h.b16 %v2254
      %v2426 = vunpack.c.l.b16 %v2255
      %v2427 = vunpack.c.h.b16 %v2255
      %v2428 = vunpack.c.l.b16 %v2256
      %v2429 = vunpack.c.h.b16 %v2256
      %v2430 = vunpack.c.l.b16 %v2257
      %v2431 = vunpack.c.h.b16 %v2257
      %v2432 = vunpack.c.l.b16 %v2258
      %v2433 = vunpack.c.h.b16 %v2258
      %v2434 = vunpack.c.l.b16 %v2259
      %v2435 = vunpack.c.h.b16 %v2259
      %v2436 = vunpack.c.l.b16 %v2260
      %v2437 = vunpack.c.h.b16 %v2260
      %v2438 = vunpack.c.l.b16 %v2261
      %v2439 = vunpack.c.h.b16 %v2261
      %v2440 = vunpack.c.l.b16 %v2262
      %v2441 = vunpack.c.h.b16 %v2262
      %v2442 = vunpack.c.l.b16 %v2263
      %v2443 = vunpack.c.h.b16 %v2263
      %v2444 = vunpack.c.l.b16 %v2264
      %v2445 = vunpack.c.h.b16 %v2264
      %v2446 = vunpack.c.l.b16 %v2265
      %v2447 = vunpack.c.h.b16 %v2265
      %v2448 = vunpack.c.l.b16 %v2266
      %v2449 = vunpack.c.h.b16 %v2266
      %v2450 = vunpack.c.l.b16 %v2267
      %v2451 = vunpack.c.h.b16 %v2267
      %v2452 = vunpack.c.l.b16 %v2268
      %v2453 = vunpack.c.h.b16 %v2268
      %v2454 = vunpack.c.l.b16 %v2269
      %v2455 = vunpack.c.h.b16 %v2269
      %v2456 = vunpack.c.l.b16 %v2270
      %v2457 = vunpack.c.h.b16 %v2270
      %v2458 = vunpack.c.l.b16 %v2271
      %v2459 = vunpack.c.h.b16 %v2271
      %v2460 = vunpack.c.l.b16 %v2272
      %v2461 = vunpack.c.h.b16 %v2272
      %v2462 = vunpack.c.l.b16 %v2273
      %v2463 = vunpack.c.h.b16 %v2273
      %v2464 = vunpack.c.l.b16 %v2274
      %v2465 = vunpack.c.h.b16 %v2274
      %v2466 = vunpack.c.l.b16 %v2275
      %v2467 = vunpack.c.h.b16 %v2275
      %v2468 = vunpack.c.l.b16 %v2276
      %v2469 = vunpack.c.h.b16 %v2276
      %v2470 = vunpack.c.l.b16 %v2277
      %v2471 = vunpack.c.h.b16 %v2277
      %v2472 = vunpack.c.l.b16 %v2278
      %v2473 = vunpack.c.h.b16 %v2278
      %v2474 = vunpack.c.l.b16 %v2279
      %v2475 = vunpack.c.h.b16 %v2279
      %v2476 = vunpack.c.l.b16 %v2280
      %v2477 = vunpack.c.h.b16 %v2280
      %v2478 = vunpack.c.l.b16 %v2281
      %v2479 = vunpack.c.h.b16 %v2281
      %v2480 = vunpack.c.l.b16 %v2282
      %v2481 = vunpack.c.h.b16 %v2282
      %v2482 = vunpack.c.l.b16 %v2283
      %v2483 = vunpack.c.h.b16 %v2283
      %v2484 = vunpack.c.l.b16 %v2284
      %v2485 = vunpack.c.h.b16 %v2284
      %v2486 = vunpack.c.l.b16 %v2285
      %v2487 = vunpack.c.h.b16 %v2285
      %v2488 = vunpack.c.l.b16 %v2286
      %v2489 = vunpack.c.h.b16 %v2286
      %v2490 = vunpack.c.l.b16 %v2287
      %v2491 = vunpack.c.h.b16 %v2287
      %v2492 = vpack.c.b16 %v2366, %v2364
      %v2493 = vpack.c.b16 %v2367, %v2365
      %v2494 = vpack.c.b16 %v2370, %v2368
      %v2495 = vpack.c.b16 %v2371, %v2369
      %v2496 = vpack.c.b16 %v2374, %v2372
      %v2497 = vpack.c.b16 %v2375, %v2373
      %v2498 = vpack.c.b16 %v2378, %v2376
      %v2499 = vpack.c.b16 %v2379, %v2377
      %v2500 = vpack.c.b16 %v2382, %v2380
      %v2501 = vpack.c.b16 %v2383, %v2381
      %v2502 = vpack.c.b16 %v2386, %v2384
      %v2503 = vpack.c.b16 %v2387, %v2385
      %v2504 = vpack.c.b16 %v2390, %v2388
      %v2505 = vpack.c.b16 %v2391, %v2389
      %v2506 = vpack.c.b16 %v2394, %v2392
      %v2507 = vpack.c.b16 %v2395, %v2393
      %v2508 = vpack.c.b16 %v2398, %v2396
      %v2509 = vpack.c.b16 %v2399, %v2397
      %v2510 = vpack.c.b16 %v2402, %v2400
      %v2511 = vpack.c.b16 %v2403, %v2401
      %v2512 = vpack.c.b16 %v2406, %v2404
      %v2513 = vpack.c.b16 %v2407, %v2405
      %v2514 = vpack.c.b16 %v2410, %v2408
      %v2515 = vpack.c.b16 %v2411, %v2409
      %v2516 = vpack.c.b16 %v2414, %v2412
      %v2517 = vpack.c.b16 %v2415, %v2413
      %v2518 = vpack.c.b16 %v2418, %v2416
      %v2519 = vpack.c.b16 %v2419, %v2417
      %v2520 = vpack.c.b16 %v2422, %v2420
      %v2521 = vpack.c.b16 %v2423, %v2421
      %v2522 = vpack.c.b16 %v2426, %v2424
      %v2523 = vpack.c.b16 %v2427, %v2425
      %v2524 = vpack.c.b16 %v2430, %v2428
      %v2525 = vpack.c.b16 %v2431, %v2429
      %v2526 = vpack.c.b16 %v2434, %v2432
      %v2527 = vpack.c.b16 %v2435, %v2433
      %v2528 = vpack.c.b16 %v2438, %v2436
      %v2529 = vpack.c.b16 %v2439, %v2437
      %v2530 = vpack.c.b16 %v2442, %v2440
      %v2531 = vpack.c.b16 %v2443, %v2441
      %v2532 = vpack.c.b16 %v2446, %v2444
      %v2533 = vpack.c.b16 %v2447, %v2445
      %v2534 = vpack.c.b16 %v2450, %v2448
      %v2535 = vpack.c.b16 %v2451, %v2449
      %v2536 = vpack.c.b16 %v2454, %v2452
      %v2537 = vpack.c.b16 %v2455, %v2453
      %v2538 = vpack.c.b16 %v2458, %v2456
      %v2539 = vpack.c.b16 %v2459, %v2457
      %v2540 = vpack.c.b16 %v2462, %v2460
      %v2541 = vpack.c.b16 %v2463, %v2461
      %v2542 = vpack.c.b16 %v2466, %v2464
      %v2543 = vpack.c.b16 %v2467, %v2465
      %v2544 = vpack.c.b16 %v2470, %v2468
      %v2545 = vpack.c.b16 %v2471, %v2469
      %v2546 = vpack.c.b16 %v2474, %v2472
      %v2547 = vpack.c.b16 %v2475, %v2473
      %v2548 = vpack.c.b16 %v2478, %v2476
      %v2549 = vpack.c.b16 %v2479, %v2477
      %v2550 = vpack.c.b16 %v2482, %v2480
      %v2551 = vpack.c.b16 %v2483, %v2481
      %v2552 = vpack.c.b16 %v2486, %v2484
      %v2553 = vpack.c.b16 %v2487, %v2485
      %v2554 = vpack.c.b16 %v2490, %v2488
      %v2555 = vpack.c.b16 %v2491, %v2489
      %2620 = vmatprep.subr.bf16.mxu0 %v2507
      %2621 = vmatpush1.bf16.msra.mxu0 %v2506
      %2622 = vmatprep.subr.bf16.mxu0 %v2505
      %2623 = vmatpush1.bf16.msra.mxu0 %v2504
      %2624 = vmatprep.subr.bf16.mxu0 %v2503
      %2625 = vmatpush1.bf16.msra.mxu0 %v2502
      %2626 = vmatprep.subr.bf16.mxu0 %v2501
      %2627 = vmatpush1.bf16.msra.mxu0 %v2500
      %2628 = vmatprep.subr.bf16.mxu0 %v2499
      %2629 = vmatpush1.bf16.msra.mxu0 %v2498
      %2630 = vmatprep.subr.bf16.mxu0 %v2497
      %2631 = vmatpush1.bf16.msra.mxu0 %v2496
      %2632 = vmatprep.subr.bf16.mxu0 %v2495
      %2633 = vmatpush1.bf16.msra.mxu0 %v2494
      %2634 = vmatprep.subr.bf16.mxu0 %v2493
      %2635 = vmatpush1.bf16.msra.mxu0 %v2492
      %2636 = vmatprep.subr.bf16.mxu0 %v2523
      %2637 = vmatpush2.bf16.msra.mxu0 %v2522
      %2638 = vmatprep.subr.bf16.mxu0 %v2521
      %2639 = vmatpush2.bf16.msra.mxu0 %v2520
      %2640 = vmatprep.subr.bf16.mxu0 %v2519
      %2641 = vmatpush2.bf16.msra.mxu0 %v2518
      %2642 = vmatprep.subr.bf16.mxu0 %v2517
      %2643 = vmatpush2.bf16.msra.mxu0 %v2516
      %2644 = vmatprep.subr.bf16.mxu0 %v2515
      %2645 = vmatpush2.bf16.msra.mxu0 %v2514
      %2646 = vmatprep.subr.bf16.mxu0 %v2513
      %2647 = vmatpush2.bf16.msra.mxu0 %v2512
      %2648 = vmatprep.subr.bf16.mxu0 %v2511
      %2649 = vmatpush2.bf16.msra.mxu0 %v2510
      %2650 = vmatprep.subr.bf16.mxu0 %v2509
      %2651 = vmatpush2.bf16.msra.mxu0 %v2508
      %2652 = vmatprep.mubr.bf16.mxu0 %v2221
      %2653 = vmatmul.mubr.bf16.gmra.mxu0 %v2220
      %v2654 = vpop.f32.mrf.mxu0
      %v2655 = vadd.f32 %v2293, %v2654
      %v2656 = vpop.f32.mrf.mxu0
      %v2657 = vadd.f32 %v2297, %v2656
      %v2658 = vpop.f32.mrf.mxu0
      %v2659 = vadd.f32 %v2293, %v2658
      %v2660 = vpop.f32.mrf.mxu0
      %v2661 = vadd.f32 %v2297, %v2660
      %2662 = vdwg.mxu0
      %2663 = vmatprep.subr.bf16.mxu0 %v2539
      %2664 = vmatpush1.bf16.msra.mxu0 %v2538
      %2665 = vmatprep.subr.bf16.mxu0 %v2537
      %2666 = vmatpush1.bf16.msra.mxu0 %v2536
      %2667 = vmatprep.subr.bf16.mxu0 %v2535
      %2668 = vmatpush1.bf16.msra.mxu0 %v2534
      %2669 = vmatprep.subr.bf16.mxu0 %v2533
      %2670 = vmatpush1.bf16.msra.mxu0 %v2532
      %2671 = vmatprep.subr.bf16.mxu0 %v2531
      %2672 = vmatpush1.bf16.msra.mxu0 %v2530
      %2673 = vmatprep.subr.bf16.mxu0 %v2529
      %2674 = vmatpush1.bf16.msra.mxu0 %v2528
      %2675 = vmatprep.subr.bf16.mxu0 %v2527
      %2676 = vmatpush1.bf16.msra.mxu0 %v2526
      %2677 = vmatprep.subr.bf16.mxu0 %v2525
      %2678 = vmatpush1.bf16.msra.mxu0 %v2524
      %2679 = vmatprep.subr.bf16.mxu0 %v2555
      %2680 = vmatpush2.bf16.msra.mxu0 %v2554
      %2681 = vmatprep.subr.bf16.mxu0 %v2553
      %2682 = vmatpush2.bf16.msra.mxu0 %v2552
      %2683 = vmatprep.subr.bf16.mxu0 %v2551
      %2684 = vmatpush2.bf16.msra.mxu0 %v2550
      %2685 = vmatprep.subr.bf16.mxu0 %v2549
      %2686 = vmatpush2.bf16.msra.mxu0 %v2548
      %2687 = vmatprep.subr.bf16.mxu0 %v2547
      %2688 = vmatpush2.bf16.msra.mxu0 %v2546
      %2689 = vmatprep.subr.bf16.mxu0 %v2545
      %2690 = vmatpush2.bf16.msra.mxu0 %v2544
      %2691 = vmatprep.subr.bf16.mxu0 %v2543
      %2692 = vmatpush2.bf16.msra.mxu0 %v2542
      %2693 = vmatprep.subr.bf16.mxu0 %v2541
      %2694 = vmatpush2.bf16.msra.mxu0 %v2540
      %2695 = vmatprep.mubr.bf16.mxu0 %v2223
      %2696 = vmatmul.mubr.bf16.gmra.mxu0 %v2222
      %v2697 = vpop.f32.mrf.mxu0
      %v2698 = vadd.f32 %v2655, %v2697
      %v2699 = vpop.f32.mrf.mxu0
      %v2700 = vadd.f32 %v2657, %v2699
      %v2701 = vpop.f32.mrf.mxu0
      %v2702 = vadd.f32 %v2659, %v2701
      %v2703 = vpop.f32.mrf.mxu0
      %v2704 = vadd.f32 %v2661, %v2703
      %2705 = vdwg.mxu0
      %v2706 = vmax.f32 %v2698, 0.0
      %v2707 = vmax.f32 %v2700, 0.0
      %v2708 = vmax.f32 %v2702, 0.0
      %v2709 = vmax.f32 %v2704, 0.0
      %v2710 = vpack.c.bf16 %v2708, %v2706
      %v2711 = vpack.c.bf16 %v2709, %v2707
      %v2712 = vld [vmem:[%s5] sm:$0xf]
      %v2713 = vld [vmem:[%s5 + $0x4] sm:$0xf]
      %v2714 = vld [vmem:[%s5 + $0x8] sm:$0xf]
      %v2715 = vld [vmem:[%s5 + $0xc] sm:$0xf]
      %v2716 = vld [vmem:[%s5 + $0x10] sm:$0xf]
      %v2717 = vld [vmem:[%s5 + $0x14] sm:$0xf]
      %v2718 = vld [vmem:[%s5 + $0x18] sm:$0xf]
      %v2719 = vld [vmem:[%s5 + $0x1c] sm:$0xf]
      %v2720 = vld [vmem:[%s5 + $0x20] sm:$0xf]
      %v2721 = vld [vmem:[%s5 + $0x24] sm:$0xf]
      %v2722 = vld [vmem:[%s5 + $0x28] sm:$0xf]
      %v2723 = vld [vmem:[%s5 + $0x2c] sm:$0xf]
      %v2724 = vld [vmem:[%s5 + $0x30] sm:$0xf]
      %v2725 = vld [vmem:[%s5 + $0x34] sm:$0xf]
      %v2726 = vld [vmem:[%s5 + $0x38] sm:$0xf]
      %v2727 = vld [vmem:[%s5 + $0x3c] sm:$0xf]
      %v2728 = vld [vmem:[%s5 + $0x40] sm:$0xf]
      %v2729 = vld [vmem:[%s5 + $0x44] sm:$0xf]
      %v2730 = vld [vmem:[%s5 + $0x48] sm:$0xf]
      %v2731 = vld [vmem:[%s5 + $0x4c] sm:$0xf]
      %v2732 = vld [vmem:[%s5 + $0x50] sm:$0xf]
      %v2733 = vld [vmem:[%s5 + $0x54] sm:$0xf]
      %v2734 = vld [vmem:[%s5 + $0x58] sm:$0xf]
      %v2735 = vld [vmem:[%s5 + $0x5c] sm:$0xf]
      %v2736 = vld [vmem:[%s5 + $0x60] sm:$0xf]
      %v2737 = vld [vmem:[%s5 + $0x64] sm:$0xf]
      %v2738 = vld [vmem:[%s5 + $0x68] sm:$0xf]
      %v2739 = vld [vmem:[%s5 + $0x6c] sm:$0xf]
      %v2740 = vld [vmem:[%s5 + $0x70] sm:$0xf]
      %v2741 = vld [vmem:[%s5 + $0x74] sm:$0xf]
      %v2742 = vld [vmem:[%s5 + $0x78] sm:$0xf]
      %v2743 = vld [vmem:[%s5 + $0x7c] sm:$0xf]
      %v2744 = vld [vmem:[%s6] sm:$0x1]
      %v2746 = vlaneseq
      %v2747 = vshrl.u32 %v2746, 7
      %v2748 = vsub.s32 0, %v2747
      %v2749 = vrot.slane %v2744, %v2748
      %v2783 = vunpack.c.l.b16 %v2712
      %v2784 = vunpack.c.l.b16 %v2713
      %v2785 = vunpack.c.l.b16 %v2714
      %v2786 = vunpack.c.l.b16 %v2715
      %v2787 = vunpack.c.l.b16 %v2716
      %v2788 = vunpack.c.l.b16 %v2717
      %v2789 = vunpack.c.l.b16 %v2718
      %v2790 = vunpack.c.l.b16 %v2719
      %v2791 = vunpack.c.l.b16 %v2720
      %v2792 = vunpack.c.l.b16 %v2721
      %v2793 = vunpack.c.l.b16 %v2722
      %v2794 = vunpack.c.l.b16 %v2723
      %v2795 = vunpack.c.l.b16 %v2724
      %v2796 = vunpack.c.l.b16 %v2725
      %v2797 = vunpack.c.l.b16 %v2726
      %v2798 = vunpack.c.l.b16 %v2727
      %v2799 = vunpack.c.l.b16 %v2728
      %v2800 = vunpack.c.l.b16 %v2729
      %v2801 = vunpack.c.l.b16 %v2730
      %v2802 = vunpack.c.l.b16 %v2731
      %v2803 = vunpack.c.l.b16 %v2732
      %v2804 = vunpack.c.l.b16 %v2733
      %v2805 = vunpack.c.l.b16 %v2734
      %v2806 = vunpack.c.l.b16 %v2735
      %v2807 = vunpack.c.l.b16 %v2736
      %v2808 = vunpack.c.l.b16 %v2737
      %v2809 = vunpack.c.l.b16 %v2738
      %v2810 = vunpack.c.l.b16 %v2739
      %v2811 = vunpack.c.l.b16 %v2740
      %v2812 = vunpack.c.l.b16 %v2741
      %v2813 = vunpack.c.l.b16 %v2742
      %v2814 = vunpack.c.l.b16 %v2743
      %v2815 = vpack.c.b16 %v2784, %v2783
      %v2816 = vpack.c.b16 %v2786, %v2785
      %v2817 = vpack.c.b16 %v2788, %v2787
      %v2818 = vpack.c.b16 %v2790, %v2789
      %v2819 = vpack.c.b16 %v2792, %v2791
      %v2820 = vpack.c.b16 %v2794, %v2793
      %v2821 = vpack.c.b16 %v2796, %v2795
      %v2822 = vpack.c.b16 %v2798, %v2797
      %v2823 = vpack.c.b16 %v2800, %v2799
      %v2824 = vpack.c.b16 %v2802, %v2801
      %v2825 = vpack.c.b16 %v2804, %v2803
      %v2826 = vpack.c.b16 %v2806, %v2805
      %v2827 = vpack.c.b16 %v2808, %v2807
      %v2828 = vpack.c.b16 %v2810, %v2809
      %v2829 = vpack.c.b16 %v2812, %v2811
      %v2830 = vpack.c.b16 %v2814, %v2813
      %2847 = vmatprep.subr.bf16.mxu0 0
      %2848 = vmatpush1.bf16.msra.mxu0 %v2822
      %2849 = vmatprep.subr.bf16.mxu0 0
      %2850 = vmatpush1.bf16.msra.mxu0 %v2821
      %2851 = vmatprep.subr.bf16.mxu0 0
      %2852 = vmatpush1.bf16.msra.mxu0 %v2820
      %2853 = vmatprep.subr.bf16.mxu0 0
      %2854 = vmatpush1.bf16.msra.mxu0 %v2819
      %2855 = vmatprep.subr.bf16.mxu0 0
      %2856 = vmatpush1.bf16.msra.mxu0 %v2818
      %2857 = vmatprep.subr.bf16.mxu0 0
      %2858 = vmatpush1.bf16.msra.mxu0 %v2817
      %2859 = vmatprep.subr.bf16.mxu0 0
      %2860 = vmatpush1.bf16.msra.mxu0 %v2816
      %2861 = vmatprep.subr.bf16.mxu0 0
      %2862 = vmatpush1.bf16.msra.mxu0 %v2815
      %2863 = vmatprep.subr.bf16.mxu0 0
      %2864 = vmatpush2.bf16.msra.mxu0 %v2830
      %2865 = vmatprep.subr.bf16.mxu0 0
      %2866 = vmatpush2.bf16.msra.mxu0 %v2829
      %2867 = vmatprep.subr.bf16.mxu0 0
      %2868 = vmatpush2.bf16.msra.mxu0 %v2828
      %2869 = vmatprep.subr.bf16.mxu0 0
      %2870 = vmatpush2.bf16.msra.mxu0 %v2827
      %2871 = vmatprep.subr.bf16.mxu0 0
      %2872 = vmatpush2.bf16.msra.mxu0 %v2826
      %2873 = vmatprep.subr.bf16.mxu0 0
      %2874 = vmatpush2.bf16.msra.mxu0 %v2825
      %2875 = vmatprep.subr.bf16.mxu0 0
      %2876 = vmatpush2.bf16.msra.mxu0 %v2824
      %2877 = vmatprep.subr.bf16.mxu0 0
      %2878 = vmatpush2.bf16.msra.mxu0 %v2823
      %2879 = vmatprep.mubr.bf16.mxu0 %v2711
      %2880 = vmatmul.mubr.bf16.gmra.mxu0 %v2710
      %v2881 = vpop.f32.mrf.mxu0
      %v2882 = vadd.f32 %v2749, %v2881
      %v2883 = vpop.f32.mrf.mxu0
      %v2884 = vpop.f32.mrf.mxu0
      %v2885 = vadd.f32 %v2749, %v2884
      %v2886 = vpop.f32.mrf.mxu0
      %2887 = vdwg.mxu0
      %2888 = vst [vmem:[%s283] sm:$0xff] %v2882
      %2889 = vst [vmem:[%s283 + $0x8] sm:$0xff] %v2885
      %s2890 = smul.u32 2, %s18
      %p2891 = scmp.lt.s32.totalorder %s2890, 3
      %s2892 = scalar_select %p2891, %s2890, 3
      %s2893 = smul.addr %s2892, 8
      %s2894 = scalar_lea.vmem %s7, %s2893
      // Predicated region
      $region49: #{multi_task_resnet_forward.1} parent=47 // pred_check
        %p2895 = pneg %p188
      $region50: #{multi_task_resnet_forward.1} parent=47 // pred_check_branch
        %2897 = sbr.rel (%p2895) target = $region52
      $region51: #{multi_task_resnet_forward.1} parent=47 // pred_region
        %s2898 = smul.u32 2, %s18
      $region52: #{multi_task_resnet_forward.1} parent=47 // pred_fallthru
        _
    $region48: #{multi_task_resnet_forward.1} parent=5 // pred_fallthru
      _
    %p2899 = scmp.le.s32.totalorder 2, %s13
    // Predicated region
    $region53: #{multi_task_resnet_forward.1} parent=5 // pred_check
      %p2900 = pneg %p2899
    $region54: #{multi_task_resnet_forward.1} parent=5 // pred_check_branch
      %2902 = sbr.rel (%p2900) target = $region56
    $region55: #{multi_task_resnet_forward.1} parent=5 // pred_region
      %s2903 = ssub.s32 %s13, 2
      // Predicated region
      $region57: #{multi_task_resnet_forward.1} parent=55 // pred_check
        %p2904 = pneg %p194
      $region58: #{multi_task_resnet_forward.1} parent=55 // pred_check_branch
        %2906 = sbr.rel (%p2904) target = $region60
      $region59: #{multi_task_resnet_forward.1} parent=55 // pred_region
        %s2907 = smul.u32 2, %s19
        %p2908 = scmp.lt.s32.totalorder %s2907, 3
        %s2909 = scalar_select %p2908, %s2907, 3
        %s2910 = smul.addr %s2909, 8
        %s2911 = scalar_lea.vmem %s7, %s2910
      $region60: #{multi_task_resnet_forward.1} parent=55 // pred_fallthru
        _
    $region56: #{multi_task_resnet_forward.1} parent=5 // pred_fallthru
      _
  $region6: #{multi_task_resnet_forward.1} parent=0 // loop_footer
    %s17 = sadd.s32 1, %s13
  $region7: #{multi_task_resnet_forward.1} parent=0 // loop_footer_branch
    %12 = sbr.rel target = $region3
  $region8: #{multi_task_resnet_forward.1} parent=0 // loop_exit
    _

</llo_original>
